<compile_context>
chip_gen: v7x
topology: tpu7x:2x2x1
jax: 0.10.0
libtpu: 0.0.40
codegen_flags: <defaults>
</compile_context>

<pallas_src>
import functools

import jax
import jax.numpy as jnp
from jax import lax
from jax.experimental import pallas as pl
from jax.experimental.pallas import tpu as pltpu


def _build_taps(x_ref, top_ref, bot_ref, y0, *, H, W, Ht, Wh):
    """Return ([9 taps of shape (C_in, Ht*W)], v_mid) for a 3x3 SAME conv.

    Tap (ky, kx) holds x[c, y + ky - 1, col + kx - 1] (0 outside the image)
    for every output position (y, col) of the current row tile, flattened to
    lane-dense (C_in, Ht*W).  The one-row top/bottom halos come from two small
    halo windows whose contents are garbage on the first/last row tile and are
    masked to zero there.
    """
    HW_t = Ht * W

    v_mid = x_ref[0]                                   # (C_in, Ht*W)
    halo_top = top_ref[0, :, Wh - W:]                  # (C_in, W)
    halo_bot = bot_ref[0, :, :W]                       # (C_in, W)

    # Vertically shifted bases (image rows y-1 / y / y+1).
    v_top = jnp.concatenate([halo_top, v_mid[:, :HW_t - W]], axis=1)
    v_bot = jnp.concatenate([v_mid[:, W:], halo_bot], axis=1)

    # Boundary masks, hoisted out of the tap loop, computed once at (1, tile).
    lpos = lax.broadcasted_iota(jnp.int32, (1, HW_t), 1)   # local flat position
    col = lpos % W
    gpos = lpos + y0 * W                                   # global flat position
    not_left = col >= 1
    not_right = col < (W - 1)
    v_top = jnp.where(gpos >= W, v_top, 0.0)               # no row above y == 0
    v_bot = jnp.where(gpos < (H - 1) * W, v_bot, 0.0)      # no row below y == H-1

    taps = []
    for base in (v_top, v_mid, v_bot):                     # ky = 0, 1, 2
        left = jnp.concatenate([base[:, :1], base[:, :HW_t - 1]], axis=1)
        right = jnp.concatenate([base[:, 1:], base[:, HW_t - 1:]], axis=1)
        taps.append(jnp.where(not_left, left, 0.0))        # kx = 0
        taps.append(base)                                   # kx = 1
        taps.append(jnp.where(not_right, right, 0.0))      # kx = 2
    return taps, v_mid


def _concat_conv_mxu_kernel(x_ref, top_ref, bot_ref, w_ref, b_ref, out_ref,
                            patch_ref, *, H, W, Ht, Wh):
    C_in = x_ref.shape[1]
    y0 = 0 if Ht == H else pl.program_id(1) * Ht
    taps, v_mid = _build_taps(x_ref, top_ref, bot_ref, y0,
                              H=H, W=W, Ht=Ht, Wh=Wh)

    # Identity half of the concat (x is read from HBM exactly once).
    out_ref[0, :C_in, :] = v_mid.astype(out_ref.dtype)

    # bf16 im2col patch, K ordered (ky, kx, c_in) to match the weight layout.
    for k, tap in enumerate(taps):
        patch_ref[k * C_in:(k + 1) * C_in, :] = tap.astype(patch_ref.dtype)

    # One fused MXU matmul over K = 9*C_in (bf16 operands, f32 accumulation).
    acc = jnp.dot(w_ref[...], patch_ref[...], preferred_element_type=jnp.float32)
    acc = jnp.maximum(acc + b_ref[...], 0.0)
    out_ref[0, C_in:, :] = acc.astype(out_ref.dtype)


def _concat_conv_vpu_kernel(x_ref, top_ref, bot_ref, w_ref, b_ref, out_ref,
                            *, H, W, Ht, Wh):
    C_in = x_ref.shape[1]
    C_out = w_ref.shape[0]
    HW_t = Ht * W
    y0 = 0 if Ht == H else pl.program_id(1) * Ht
    taps, v_mid = _build_taps(x_ref, top_ref, bot_ref, y0,
                              H=H, W=W, Ht=Ht, Wh=Wh)

    out_ref[0, :C_in, :] = v_mid.astype(out_ref.dtype)

    # Tiny C_out: the MXU would be <2% utilized, so accumulate on the VPU as
    # 9*C_in broadcast-FMAs (no im2col scratch, no MXU push/drain latency).
    wv = w_ref[...]                                      # (C_out, 9*C_in) f32
    acc = jnp.zeros((C_out, HW_t), jnp.float32) + b_ref[...]
    for k, tap in enumerate(taps):
        for c in range(C_in):
            idx = k * C_in + c
            acc = acc + wv[:, idx:idx + 1] * tap[c:c + 1, :]
    out_ref[0, C_in:, :] = jnp.maximum(acc, 0.0).astype(out_ref.dtype)


def _pick_row_tile(N, C_in, C_out, H, W, use_mxu):
    """Largest divisor Ht of H whose per-step VMEM footprint fits the budget.

    The budget targets the smallest generation (v7x: 64 MiB physical VMEM);
    v5e/v6e just get extra headroom.  When N == 1 we force >= 2 row tiles so
    both v7x TensorCores receive grid steps.
    """
    HW = H * W
    C_total = C_in + C_out
    budget = 40 * 2 ** 20
    halo_bytes = 2 * 2 * C_in * min(128, HW) * 4

    def step_bytes(ht):
        b = 2 * C_in * ht * W * 4 + halo_bytes      # input tile (double-buffered)
        b += 2 * C_total * ht * W * 4               # output tile (double-buffered)
        if use_mxu:
            b += 9 * C_in * ht * W * 2              # bf16 im2col scratch
        return b

    can_split = (W % 128 == 0) or (W <= 128)
    want_multi = (N == 1 and H > 1)
    for ht in [d for d in range(H, 0, -1) if H % d == 0]:
        if ht == H:
            if want_multi:
                continue
            if step_bytes(ht) <= budget:
                return ht
            continue
        if not can_split or ht < 8 or (ht * W) % 128 != 0:
            continue
        if step_bytes(ht) <= budget:
            return ht
    # TODO(synk): for images too large even for a one-row tile, also tile W /
    # output channels; not needed at SRTGAN shapes.
    return H


def _vmem_limit_bytes():
    try:
        cap = int(pltpu.get_tpu_info().vmem_capacity_bytes)
    except Exception:
        cap = 64 * 2 ** 20                  # assume the smallest (v7x) if unknown
    return min(cap * 3 // 4, 100 * 2 ** 20)


def make_concat_block(w, b):
    """Build the ConcatBlock forward (params prepared once, at init time).

    w: (C_out, C_in, 3, 3) conv weight (OIHW), b: (C_out,) bias.
    forward(x): x (N, C_in, H, W) -> concat([x, relu(conv3x3_same(x))], axis=1)
    """
    C_out, C_in, kh, kw = w.shape
    assert (kh, kw) == (3, 3), "the fused sub-block is a 3x3 conv"
    use_mxu = C_out >= 16           # tiny C_out is cheaper on the VPU

    # One-time layout plumbing: K axis ordered (ky, kx, c_in); bf16 weights for
    # the MXU path (accumulation stays f32), f32 for the VPU path.
    w_flat = jnp.transpose(w, (0, 2, 3, 1)).reshape(C_out, 9 * C_in)
    w_flat = w_flat.astype(jnp.bfloat16 if use_mxu else jnp.float32)
    b2d = jnp.asarray(b).reshape(C_out, 1).astype(jnp.float32)

    def forward(x):
        N, c_in_x, H, W = x.shape
        assert c_in_x == C_in
        HW = H * W
        C_total = C_in + C_out

        Ht = _pick_row_tile(N, C_in, C_out, H, W, use_mxu)
        n_rt = H // Ht
        Wh = W if W % 128 == 0 else min(128, HW)    # halo-window lane width
        bpt = (Ht * W) // Wh                         # Wh-blocks per row tile
        nwb = max(HW // Wh, 1)                       # Wh-blocks in the image

        x_flat = x.reshape(N, C_in, HW)              # lane-dense spatial layout

        kern = functools.partial(
            _concat_conv_mxu_kernel if use_mxu else _concat_conv_vpu_kernel,
            H=H, W=W, Ht=Ht, Wh=Wh)
        scratch = ([pltpu.VMEM((9 * C_in, Ht * W), jnp.bfloat16)]
                   if use_mxu else [])

        out_flat = pl.pallas_call(
            kern,
            out_shape=jax.ShapeDtypeStruct((N, C_total, HW), x.dtype),
            grid_spec=pltpu.PrefetchScalarGridSpec(
                num_scalar_prefetch=0,
                grid=(N, n_rt),
                in_specs=[
                    # lane-dense row tile of the image
                    pl.BlockSpec((1, C_in, Ht * W), lambda n, r: (n, 0, r)),
                    # window holding the image row just above the tile
                    pl.BlockSpec(
                        (1, C_in, Wh),
                        lambda n, r: (n, 0, jnp.maximum(r * bpt - 1, 0))),
                    # window holding the image row just below the tile
                    pl.BlockSpec(
                        (1, C_in, Wh),
                        lambda n, r: (n, 0,
                                      jnp.minimum((r + 1) * bpt, nwb - 1))),
                    pl.BlockSpec((C_out, 9 * C_in), lambda n, r: (0, 0)),
                    pl.BlockSpec((C_out, 1), lambda n, r: (0, 0)),
                ],
                out_specs=pl.BlockSpec((1, C_total, Ht * W),
                                       lambda n, r: (n, 0, r)),
                scratch_shapes=scratch,
            ),
            compiler_params=pltpu.CompilerParams(
                dimension_semantics=("parallel", "parallel"),
                vmem_limit_bytes=_vmem_limit_bytes(),
            ),
        )(x_flat, x_flat, x_flat, w_flat, b2d)

        return out_flat.reshape(N, C_total, H, W)

    return jax.jit(forward)


def _reference(x, w, b):
    y = lax.conv_general_dilated(
        x, w, window_strides=(1, 1), padding="SAME",
        dimension_numbers=("NCHW", "OIHW", "NCHW"))
    y = jnp.maximum(y + b.reshape(1, -1, 1, 1), 0.0)
    return jnp.concatenate([x, y], axis=1)


if __name__ == "__main__":
    key = jax.random.PRNGKey(0)
    k1, k2, k3, k4, k5, k6 = jax.random.split(key, 6)

    # 1) Small module-sized shape: f32 VPU path, single row tile per image.
    N, C_in, H, W, C_out = 2, 4, 16, 16, 4
    x = jax.random.normal(k1, (N, C_in, H, W), dtype=jnp.float32)
    w = jax.random.normal(k2, (C_out, C_in, 3, 3), dtype=jnp.float32) * 0.1
    b = jax.random.normal(k3, (C_out,), dtype=jnp.float32) * 0.1

    fwd = make_concat_block(w, b)
    out = jax.block_until_ready(fwd(x))
    ref = _reference(x, w, b)
    assert out.shape == (N, C_in + C_out, H, W), out.shape
    assert jnp.allclose(out, ref, atol=1e-4, rtol=1e-4), (
        float(jnp.max(jnp.abs(out - ref))))

    # 2) Larger shape: exercises the row-tiled halo + bf16 MXU path (N=1 forces
    #    >= 2 row tiles, so the top/bottom halo logic is genuinely used).
    N2, C2, H2, W2, Co2 = 1, 32, 32, 32, 32
    x2 = jax.random.normal(k4, (N2, C2, H2, W2), dtype=jnp.float32)
    w2 = jax.random.normal(k5, (Co2, C2, 3, 3), dtype=jnp.float32) * 0.05
    b2 = jax.random.normal(k6, (Co2,), dtype=jnp.float32) * 0.05

    fwd2 = make_concat_block(w2, b2)
    out2 = jax.block_until_ready(fwd2(x2))
    ref2 = _reference(x2, w2, b2)
    assert out2.shape == (N2, C2 + Co2, H2, W2), out2.shape
    err = float(jnp.max(jnp.abs(out2 - ref2)))
    assert err < 5e-2, err   # bf16 patch/weights, f32 accumulation

    print("KERNEL_OK")
</pallas_src>

<mosaic_0001>
module attributes {stable_mosaic.version = 11 : i64} {
  func.func @_concat_conv_vpu_kernel(%arg0: i32, %arg1: i32, %arg2: memref<1x4x256xf32, #tpu.memory_space<vmem>>, %arg3: memref<1x4x128xf32, #tpu.memory_space<vmem>>, %arg4: memref<1x4x128xf32, #tpu.memory_space<vmem>>, %arg5: memref<4x36xf32, #tpu.memory_space<vmem>>, %arg6: memref<4x1xf32, #tpu.memory_space<vmem>>, %arg7: memref<1x8x256xf32, #tpu.memory_space<vmem>>) attributes {dimension_semantics = [#tpu.dimension_semantics<parallel>, #tpu.dimension_semantics<parallel>], iteration_bounds = array<i64: 2, 1>, scalar_prefetch = 0 : i64, scratch_operands = 0 : i64, tpu.core_type = #tpu.core_type<tc>, window_params = [{transform_indices = @transform_0, window_bounds = array<i64: 1, 4, 256>}, {transform_indices = @transform_1, window_bounds = array<i64: 1, 4, 128>}, {transform_indices = @transform_2, window_bounds = array<i64: 1, 4, 128>}, {pipeline_mode = #tpu.pipeline_mode<synchronous>, transform_indices = @transform_3, window_bounds = array<i64: 4, 36>}, {pipeline_mode = #tpu.pipeline_mode<synchronous>, transform_indices = @transform_4, window_bounds = array<i64: 4, 1>}, {transform_indices = @transform_5, window_bounds = array<i64: 1, 8, 256>}]} {
    %c0 = arith.constant 0 : index
    %c0_0 = arith.constant 0 : index
    %c0_1 = arith.constant 0 : index
    %0 = vector.load %arg2[%c0, %c0_0, %c0_1] : memref<1x4x256xf32, #tpu.memory_space<vmem>>, vector<1x4x256xf32>
    %1 = vector.shape_cast %0 : vector<1x4x256xf32> to vector<4x256xf32>
    %c0_2 = arith.constant 0 : index
    %c0_3 = arith.constant 0 : index
    %c112 = arith.constant 112 : index
    %2 = vector.load %arg3[%c0_2, %c0_3, %c112] : memref<1x4x128xf32, #tpu.memory_space<vmem>>, vector<1x4x16xf32>
    %3 = vector.shape_cast %2 : vector<1x4x16xf32> to vector<4x16xf32>
    %c0_4 = arith.constant 0 : index
    %c0_5 = arith.constant 0 : index
    %c0_6 = arith.constant 0 : index
    %4 = vector.load %arg4[%c0_4, %c0_5, %c0_6] : memref<1x4x128xf32, #tpu.memory_space<vmem>>, vector<1x4x16xf32>
    %5 = vector.shape_cast %4 : vector<1x4x16xf32> to vector<4x16xf32>
    %6 = vector.extract_strided_slice %1 {offsets = [0, 0], sizes = [4, 240], strides = [1, 1]} : vector<4x256xf32> to vector<4x240xf32>
    %7 = tpu.concatenate %3, %6 in 1 : vector<4x16xf32>, vector<4x240xf32> -> vector<4x256xf32>
    %8 = vector.extract_strided_slice %1 {offsets = [0, 16], sizes = [4, 240], strides = [1, 1]} : vector<4x256xf32> to vector<4x240xf32>
    %9 = tpu.concatenate %8, %5 in 1 : vector<4x240xf32>, vector<4x16xf32> -> vector<4x256xf32>
    %10 = tpu.iota {dimensions = array<i32: 1>} : vector<1x256xi32>
    %c16_i32 = arith.constant 16 : i32
    %c0_i32 = arith.constant 0 : i32
    %11 = arith.cmpi eq, %c16_i32, %c0_i32 : i32
    %c1_i32 = arith.constant 1 : i32
    %12 = arith.select %11, %c1_i32, %c16_i32 : i32
    %13 = vector.broadcast %12 : i32 to vector<1x256xi32>
    %14 = arith.remsi %10, %13 : vector<1x256xi32>
    %c0_i32_7 = arith.constant 0 : i32
    %15 = vector.broadcast %c0_i32_7 : i32 to vector<1x256xi32>
    %16 = arith.cmpi ne, %14, %15 : vector<1x256xi32>
    %c0_i32_8 = arith.constant 0 : i32
    %17 = vector.broadcast %c0_i32_8 : i32 to vector<1x256xi32>
    %18 = arith.cmpi slt, %14, %17 : vector<1x256xi32>
    %c0_i32_9 = arith.constant 0 : i32
    %19 = arith.cmpi slt, %12, %c0_i32_9 : i32
    %20 = vector.broadcast %19 : i1 to vector<1x256xi1>
    %21 = vector.broadcast %20 : vector<1x256xi1> to vector<1x256xi1>
    %22 = arith.xori %18, %21 : vector<1x256xi1>
    %23 = arith.andi %22, %16 : vector<1x256xi1>
    %24 = vector.broadcast %12 : i32 to vector<1x256xi32>
    %25 = arith.addi %14, %24 : vector<1x256xi32>
    %26 = arith.select %23, %25, %14 : vector<1x256xi1>, vector<1x256xi32>
    %c0_i32_10 = arith.constant 0 : i32
    %27 = vector.broadcast %c0_i32_10 : i32 to vector<1x256xi32>
    %28 = arith.addi %10, %27 : vector<1x256xi32>
    %c1_i32_11 = arith.constant 1 : i32
    %29 = vector.broadcast %c1_i32_11 : i32 to vector<1x256xi32>
    %30 = arith.cmpi sge, %26, %29 : vector<1x256xi32>
    %c15_i32 = arith.constant 15 : i32
    %31 = vector.broadcast %c15_i32 : i32 to vector<1x256xi32>
    %32 = arith.cmpi slt, %26, %31 : vector<1x256xi32>
    %c16_i32_12 = arith.constant 16 : i32
    %33 = vector.broadcast %c16_i32_12 : i32 to vector<1x256xi32>
    %34 = arith.cmpi sge, %28, %33 : vector<1x256xi32>
    %cst = arith.constant 0.000000e+00 : f32
    %35 = vector.shape_cast %34 : vector<1x256xi1> to vector<1x256xi1>
    %36 = vector.broadcast %35 : vector<1x256xi1> to vector<4x256xi1>
    %37 = vector.broadcast %cst : f32 to vector<4x256xf32>
    %38 = arith.select %36, %7, %37 : vector<4x256xi1>, vector<4x256xf32>
    %c240_i32 = arith.constant 240 : i32
    %39 = vector.broadcast %c240_i32 : i32 to vector<1x256xi32>
    %40 = arith.cmpi slt, %28, %39 : vector<1x256xi32>
    %cst_13 = arith.constant 0.000000e+00 : f32
    %41 = vector.shape_cast %40 : vector<1x256xi1> to vector<1x256xi1>
    %42 = vector.broadcast %41 : vector<1x256xi1> to vector<4x256xi1>
    %43 = vector.broadcast %cst_13 : f32 to vector<4x256xf32>
    %44 = arith.select %42, %9, %43 : vector<4x256xi1>, vector<4x256xf32>
    %45 = vector.extract_strided_slice %38 {offsets = [0, 0], sizes = [4, 1], strides = [1, 1]} : vector<4x256xf32> to vector<4x1xf32>
    %46 = vector.extract_strided_slice %38 {offsets = [0, 0], sizes = [4, 255], strides = [1, 1]} : vector<4x256xf32> to vector<4x255xf32>
    %47 = tpu.concatenate %45, %46 in 1 : vector<4x1xf32>, vector<4x255xf32> -> vector<4x256xf32>
    %48 = vector.extract_strided_slice %38 {offsets = [0, 1], sizes = [4, 255], strides = [1, 1]} : vector<4x256xf32> to vector<4x255xf32>
    %49 = vector.extract_strided_slice %38 {offsets = [0, 255], sizes = [4, 1], strides = [1, 1]} : vector<4x256xf32> to vector<4x1xf32>
    %50 = tpu.concatenate %48, %49 in 1 : vector<4x255xf32>, vector<4x1xf32> -> vector<4x256xf32>
    %cst_14 = arith.constant 0.000000e+00 : f32
    %51 = vector.shape_cast %30 : vector<1x256xi1> to vector<1x256xi1>
    %52 = vector.broadcast %51 : vector<1x256xi1> to vector<4x256xi1>
    %53 = vector.broadcast %cst_14 : f32 to vector<4x256xf32>
    %54 = arith.select %52, %47, %53 : vector<4x256xi1>, vector<4x256xf32>
    %cst_15 = arith.constant 0.000000e+00 : f32
    %55 = vector.shape_cast %32 : vector<1x256xi1> to vector<1x256xi1>
    %56 = vector.broadcast %55 : vector<1x256xi1> to vector<4x256xi1>
    %57 = vector.broadcast %cst_15 : f32 to vector<4x256xf32>
    %58 = arith.select %56, %50, %57 : vector<4x256xi1>, vector<4x256xf32>
    %59 = vector.extract_strided_slice %1 {offsets = [0, 0], sizes = [4, 1], strides = [1, 1]} : vector<4x256xf32> to vector<4x1xf32>
    %60 = vector.extract_strided_slice %1 {offsets = [0, 0], sizes = [4, 255], strides = [1, 1]} : vector<4x256xf32> to vector<4x255xf32>
    %61 = tpu.concatenate %59, %60 in 1 : vector<4x1xf32>, vector<4x255xf32> -> vector<4x256xf32>
    %62 = vector.extract_strided_slice %1 {offsets = [0, 1], sizes = [4, 255], strides = [1, 1]} : vector<4x256xf32> to vector<4x255xf32>
    %63 = vector.extract_strided_slice %1 {offsets = [0, 255], sizes = [4, 1], strides = [1, 1]} : vector<4x256xf32> to vector<4x1xf32>
    %64 = tpu.concatenate %62, %63 in 1 : vector<4x255xf32>, vector<4x1xf32> -> vector<4x256xf32>
    %cst_16 = arith.constant 0.000000e+00 : f32
    %65 = vector.shape_cast %30 : vector<1x256xi1> to vector<1x256xi1>
    %66 = vector.broadcast %65 : vector<1x256xi1> to vector<4x256xi1>
    %67 = vector.broadcast %cst_16 : f32 to vector<4x256xf32>
    %68 = arith.select %66, %61, %67 : vector<4x256xi1>, vector<4x256xf32>
    %cst_17 = arith.constant 0.000000e+00 : f32
    %69 = vector.shape_cast %32 : vector<1x256xi1> to vector<1x256xi1>
    %70 = vector.broadcast %69 : vector<1x256xi1> to vector<4x256xi1>
    %71 = vector.broadcast %cst_17 : f32 to vector<4x256xf32>
    %72 = arith.select %70, %64, %71 : vector<4x256xi1>, vector<4x256xf32>
    %73 = vector.extract_strided_slice %44 {offsets = [0, 0], sizes = [4, 1], strides = [1, 1]} : vector<4x256xf32> to vector<4x1xf32>
    %74 = vector.extract_strided_slice %44 {offsets = [0, 0], sizes = [4, 255], strides = [1, 1]} : vector<4x256xf32> to vector<4x255xf32>
    %75 = tpu.concatenate %73, %74 in 1 : vector<4x1xf32>, vector<4x255xf32> -> vector<4x256xf32>
    %76 = vector.extract_strided_slice %44 {offsets = [0, 1], sizes = [4, 255], strides = [1, 1]} : vector<4x256xf32> to vector<4x255xf32>
    %77 = vector.extract_strided_slice %44 {offsets = [0, 255], sizes = [4, 1], strides = [1, 1]} : vector<4x256xf32> to vector<4x1xf32>
    %78 = tpu.concatenate %76, %77 in 1 : vector<4x255xf32>, vector<4x1xf32> -> vector<4x256xf32>
    %cst_18 = arith.constant 0.000000e+00 : f32
    %79 = vector.shape_cast %30 : vector<1x256xi1> to vector<1x256xi1>
    %80 = vector.broadcast %79 : vector<1x256xi1> to vector<4x256xi1>
    %81 = vector.broadcast %cst_18 : f32 to vector<4x256xf32>
    %82 = arith.select %80, %75, %81 : vector<4x256xi1>, vector<4x256xf32>
    %cst_19 = arith.constant 0.000000e+00 : f32
    %83 = vector.shape_cast %32 : vector<1x256xi1> to vector<1x256xi1>
    %84 = vector.broadcast %83 : vector<1x256xi1> to vector<4x256xi1>
    %85 = vector.broadcast %cst_19 : f32 to vector<4x256xf32>
    %86 = arith.select %84, %78, %85 : vector<4x256xi1>, vector<4x256xf32>
    %c0_20 = arith.constant 0 : index
    %c0_21 = arith.constant 0 : index
    %c0_22 = arith.constant 0 : index
    %87 = vector.load %arg7[%c0_20, %c0_21, %c0_22] : memref<1x8x256xf32, #tpu.memory_space<vmem>>, vector<1x4x256xf32>
    %88 = vector.shape_cast %87 : vector<1x4x256xf32> to vector<4x256xf32>
    %89 = vector.shape_cast %1 : vector<4x256xf32> to vector<1x4x256xf32>
    tpu.vector_store %arg7[%c0_20, %c0_21, %c0_22], %89 {strides = array<i32>} : memref<1x8x256xf32, #tpu.memory_space<vmem>>, vector<1x4x256xf32>,
    %c0_23 = arith.constant 0 : index
    %c0_24 = arith.constant 0 : index
    %90 = vector.load %arg5[%c0_23, %c0_24] : memref<4x36xf32, #tpu.memory_space<vmem>>, vector<4x36xf32>
    %cst_25 = arith.constant 0.000000e+00 : f32
    %91 = vector.broadcast %cst_25 : f32 to vector<4x256xf32>
    %c0_26 = arith.constant 0 : index
    %c0_27 = arith.constant 0 : index
    %92 = vector.load %arg6[%c0_26, %c0_27] : memref<4x1xf32, #tpu.memory_space<vmem>>, vector<4x1xf32>
    %93 = vector.broadcast %92 : vector<4x1xf32> to vector<4x256xf32>
    %94 = arith.addf %91, %93 : vector<4x256xf32>
    %95 = vector.extract_strided_slice %90 {offsets = [0, 0], sizes = [4, 1], strides = [1, 1]} : vector<4x36xf32> to vector<4x1xf32>
    %96 = vector.extract_strided_slice %54 {offsets = [0, 0], sizes = [1, 256], strides = [1, 1]} : vector<4x256xf32> to vector<1x256xf32>
    %97 = vector.broadcast %95 : vector<4x1xf32> to vector<4x256xf32>
    %98 = vector.broadcast %96 : vector<1x256xf32> to vector<4x256xf32>
    %99 = arith.mulf %97, %98 : vector<4x256xf32>
    %100 = arith.addf %94, %99 : vector<4x256xf32>
    %101 = vector.extract_strided_slice %90 {offsets = [0, 1], sizes = [4, 1], strides = [1, 1]} : vector<4x36xf32> to vector<4x1xf32>
    %102 = vector.extract_strided_slice %54 {offsets = [1, 0], sizes = [1, 256], strides = [1, 1]} : vector<4x256xf32> to vector<1x256xf32>
    %103 = vector.broadcast %101 : vector<4x1xf32> to vector<4x256xf32>
    %104 = vector.broadcast %102 : vector<1x256xf32> to vector<4x256xf32>
    %105 = arith.mulf %103, %104 : vector<4x256xf32>
    %106 = arith.addf %100, %105 : vector<4x256xf32>
    %107 = vector.extract_strided_slice %90 {offsets = [0, 2], sizes = [4, 1], strides = [1, 1]} : vector<4x36xf32> to vector<4x1xf32>
    %108 = vector.extract_strided_slice %54 {offsets = [2, 0], sizes = [1, 256], strides = [1, 1]} : vector<4x256xf32> to vector<1x256xf32>
    %109 = vector.broadcast %107 : vector<4x1xf32> to vector<4x256xf32>
    %110 = vector.broadcast %108 : vector<1x256xf32> to vector<4x256xf32>
    %111 = arith.mulf %109, %110 : vector<4x256xf32>
    %112 = arith.addf %106, %111 : vector<4x256xf32>
    %113 = vector.extract_strided_slice %90 {offsets = [0, 3], sizes = [4, 1], strides = [1, 1]} : vector<4x36xf32> to vector<4x1xf32>
    %114 = vector.extract_strided_slice %54 {offsets = [3, 0], sizes = [1, 256], strides = [1, 1]} : vector<4x256xf32> to vector<1x256xf32>
    %115 = vector.broadcast %113 : vector<4x1xf32> to vector<4x256xf32>
    %116 = vector.broadcast %114 : vector<1x256xf32> to vector<4x256xf32>
    %117 = arith.mulf %115, %116 : vector<4x256xf32>
    %118 = arith.addf %112, %117 : vector<4x256xf32>
    %119 = vector.extract_strided_slice %90 {offsets = [0, 4], sizes = [4, 1], strides = [1, 1]} : vector<4x36xf32> to vector<4x1xf32>
    %120 = vector.extract_strided_slice %38 {offsets = [0, 0], sizes = [1, 256], strides = [1, 1]} : vector<4x256xf32> to vector<1x256xf32>
    %121 = vector.broadcast %119 : vector<4x1xf32> to vector<4x256xf32>
    %122 = vector.broadcast %120 : vector<1x256xf32> to vector<4x256xf32>
    %123 = arith.mulf %121, %122 : vector<4x256xf32>
    %124 = arith.addf %118, %123 : vector<4x256xf32>
    %125 = vector.extract_strided_slice %90 {offsets = [0, 5], sizes = [4, 1], strides = [1, 1]} : vector<4x36xf32> to vector<4x1xf32>
    %126 = vector.extract_strided_slice %38 {offsets = [1, 0], sizes = [1, 256], strides = [1, 1]} : vector<4x256xf32> to vector<1x256xf32>
    %127 = vector.broadcast %125 : vector<4x1xf32> to vector<4x256xf32>
    %128 = vector.broadcast %126 : vector<1x256xf32> to vector<4x256xf32>
    %129 = arith.mulf %127, %128 : vector<4x256xf32>
    %130 = arith.addf %124, %129 : vector<4x256xf32>
    %131 = vector.extract_strided_slice %90 {offsets = [0, 6], sizes = [4, 1], strides = [1, 1]} : vector<4x36xf32> to vector<4x1xf32>
    %132 = vector.extract_strided_slice %38 {offsets = [2, 0], sizes = [1, 256], strides = [1, 1]} : vector<4x256xf32> to vector<1x256xf32>
    %133 = vector.broadcast %131 : vector<4x1xf32> to vector<4x256xf32>
    %134 = vector.broadcast %132 : vector<1x256xf32> to vector<4x256xf32>
    %135 = arith.mulf %133, %134 : vector<4x256xf32>
    %136 = arith.addf %130, %135 : vector<4x256xf32>
    %137 = vector.extract_strided_slice %90 {offsets = [0, 7], sizes = [4, 1], strides = [1, 1]} : vector<4x36xf32> to vector<4x1xf32>
    %138 = vector.extract_strided_slice %38 {offsets = [3, 0], sizes = [1, 256], strides = [1, 1]} : vector<4x256xf32> to vector<1x256xf32>
    %139 = vector.broadcast %137 : vector<4x1xf32> to vector<4x256xf32>
    %140 = vector.broadcast %138 : vector<1x256xf32> to vector<4x256xf32>
    %141 = arith.mulf %139, %140 : vector<4x256xf32>
    %142 = arith.addf %136, %141 : vector<4x256xf32>
    %143 = vector.extract_strided_slice %90 {offsets = [0, 8], sizes = [4, 1], strides = [1, 1]} : vector<4x36xf32> to vector<4x1xf32>
    %144 = vector.extract_strided_slice %58 {offsets = [0, 0], sizes = [1, 256], strides = [1, 1]} : vector<4x256xf32> to vector<1x256xf32>
    %145 = vector.broadcast %143 : vector<4x1xf32> to vector<4x256xf32>
    %146 = vector.broadcast %144 : vector<1x256xf32> to vector<4x256xf32>
    %147 = arith.mulf %145, %146 : vector<4x256xf32>
    %148 = arith.addf %142, %147 : vector<4x256xf32>
    %149 = vector.extract_strided_slice %90 {offsets = [0, 9], sizes = [4, 1], strides = [1, 1]} : vector<4x36xf32> to vector<4x1xf32>
    %150 = vector.extract_strided_slice %58 {offsets = [1, 0], sizes = [1, 256], strides = [1, 1]} : vector<4x256xf32> to vector<1x256xf32>
    %151 = vector.broadcast %149 : vector<4x1xf32> to vector<4x256xf32>
    %152 = vector.broadcast %150 : vector<1x256xf32> to vector<4x256xf32>
    %153 = arith.mulf %151, %152 : vector<4x256xf32>
    %154 = arith.addf %148, %153 : vector<4x256xf32>
    %155 = vector.extract_strided_slice %90 {offsets = [0, 10], sizes = [4, 1], strides = [1, 1]} : vector<4x36xf32> to vector<4x1xf32>
    %156 = vector.extract_strided_slice %58 {offsets = [2, 0], sizes = [1, 256], strides = [1, 1]} : vector<4x256xf32> to vector<1x256xf32>
    %157 = vector.broadcast %155 : vector<4x1xf32> to vector<4x256xf32>
    %158 = vector.broadcast %156 : vector<1x256xf32> to vector<4x256xf32>
    %159 = arith.mulf %157, %158 : vector<4x256xf32>
    %160 = arith.addf %154, %159 : vector<4x256xf32>
    %161 = vector.extract_strided_slice %90 {offsets = [0, 11], sizes = [4, 1], strides = [1, 1]} : vector<4x36xf32> to vector<4x1xf32>
    %162 = vector.extract_strided_slice %58 {offsets = [3, 0], sizes = [1, 256], strides = [1, 1]} : vector<4x256xf32> to vector<1x256xf32>
    %163 = vector.broadcast %161 : vector<4x1xf32> to vector<4x256xf32>
    %164 = vector.broadcast %162 : vector<1x256xf32> to vector<4x256xf32>
    %165 = arith.mulf %163, %164 : vector<4x256xf32>
    %166 = arith.addf %160, %165 : vector<4x256xf32>
    %167 = vector.extract_strided_slice %90 {offsets = [0, 12], sizes = [4, 1], strides = [1, 1]} : vector<4x36xf32> to vector<4x1xf32>
    %168 = vector.extract_strided_slice %68 {offsets = [0, 0], sizes = [1, 256], strides = [1, 1]} : vector<4x256xf32> to vector<1x256xf32>
    %169 = vector.broadcast %167 : vector<4x1xf32> to vector<4x256xf32>
    %170 = vector.broadcast %168 : vector<1x256xf32> to vector<4x256xf32>
    %171 = arith.mulf %169, %170 : vector<4x256xf32>
    %172 = arith.addf %166, %171 : vector<4x256xf32>
    %173 = vector.extract_strided_slice %90 {offsets = [0, 13], sizes = [4, 1], strides = [1, 1]} : vector<4x36xf32> to vector<4x1xf32>
    %174 = vector.extract_strided_slice %68 {offsets = [1, 0], sizes = [1, 256], strides = [1, 1]} : vector<4x256xf32> to vector<1x256xf32>
    %175 = vector.broadcast %173 : vector<4x1xf32> to vector<4x256xf32>
    %176 = vector.broadcast %174 : vector<1x256xf32> to vector<4x256xf32>
    %177 = arith.mulf %175, %176 : vector<4x256xf32>
    %178 = arith.addf %172, %177 : vector<4x256xf32>
    %179 = vector.extract_strided_slice %90 {offsets = [0, 14], sizes = [4, 1], strides = [1, 1]} : vector<4x36xf32> to vector<4x1xf32>
    %180 = vector.extract_strided_slice %68 {offsets = [2, 0], sizes = [1, 256], strides = [1, 1]} : vector<4x256xf32> to vector<1x256xf32>
    %181 = vector.broadcast %179 : vector<4x1xf32> to vector<4x256xf32>
    %182 = vector.broadcast %180 : vector<1x256xf32> to vector<4x256xf32>
    %183 = arith.mulf %181, %182 : vector<4x256xf32>
    %184 = arith.addf %178, %183 : vector<4x256xf32>
    %185 = vector.extract_strided_slice %90 {offsets = [0, 15], sizes = [4, 1], strides = [1, 1]} : vector<4x36xf32> to vector<4x1xf32>
    %186 = vector.extract_strided_slice %68 {offsets = [3, 0], sizes = [1, 256], strides = [1, 1]} : vector<4x256xf32> to vector<1x256xf32>
    %187 = vector.broadcast %185 : vector<4x1xf32> to vector<4x256xf32>
    %188 = vector.broadcast %186 : vector<1x256xf32> to vector<4x256xf32>
    %189 = arith.mulf %187, %188 : vector<4x256xf32>
    %190 = arith.addf %184, %189 : vector<4x256xf32>
    %191 = vector.extract_strided_slice %90 {offsets = [0, 16], sizes = [4, 1], strides = [1, 1]} : vector<4x36xf32> to vector<4x1xf32>
    %192 = vector.extract_strided_slice %1 {offsets = [0, 0], sizes = [1, 256], strides = [1, 1]} : vector<4x256xf32> to vector<1x256xf32>
    %193 = vector.broadcast %191 : vector<4x1xf32> to vector<4x256xf32>
    %194 = vector.broadcast %192 : vector<1x256xf32> to vector<4x256xf32>
    %195 = arith.mulf %193, %194 : vector<4x256xf32>
    %196 = arith.addf %190, %195 : vector<4x256xf32>
    %197 = vector.extract_strided_slice %90 {offsets = [0, 17], sizes = [4, 1], strides = [1, 1]} : vector<4x36xf32> to vector<4x1xf32>
    %198 = vector.extract_strided_slice %1 {offsets = [1, 0], sizes = [1, 256], strides = [1, 1]} : vector<4x256xf32> to vector<1x256xf32>
    %199 = vector.broadcast %197 : vector<4x1xf32> to vector<4x256xf32>
    %200 = vector.broadcast %198 : vector<1x256xf32> to vector<4x256xf32>
    %201 = arith.mulf %199, %200 : vector<4x256xf32>
    %202 = arith.addf %196, %201 : vector<4x256xf32>
    %203 = vector.extract_strided_slice %90 {offsets = [0, 18], sizes = [4, 1], strides = [1, 1]} : vector<4x36xf32> to vector<4x1xf32>
    %204 = vector.extract_strided_slice %1 {offsets = [2, 0], sizes = [1, 256], strides = [1, 1]} : vector<4x256xf32> to vector<1x256xf32>
    %205 = vector.broadcast %203 : vector<4x1xf32> to vector<4x256xf32>
    %206 = vector.broadcast %204 : vector<1x256xf32> to vector<4x256xf32>
    %207 = arith.mulf %205, %206 : vector<4x256xf32>
    %208 = arith.addf %202, %207 : vector<4x256xf32>
    %209 = vector.extract_strided_slice %90 {offsets = [0, 19], sizes = [4, 1], strides = [1, 1]} : vector<4x36xf32> to vector<4x1xf32>
    %210 = vector.extract_strided_slice %1 {offsets = [3, 0], sizes = [1, 256], strides = [1, 1]} : vector<4x256xf32> to vector<1x256xf32>
    %211 = vector.broadcast %209 : vector<4x1xf32> to vector<4x256xf32>
    %212 = vector.broadcast %210 : vector<1x256xf32> to vector<4x256xf32>
    %213 = arith.mulf %211, %212 : vector<4x256xf32>
    %214 = arith.addf %208, %213 : vector<4x256xf32>
    %215 = vector.extract_strided_slice %90 {offsets = [0, 20], sizes = [4, 1], strides = [1, 1]} : vector<4x36xf32> to vector<4x1xf32>
    %216 = vector.extract_strided_slice %72 {offsets = [0, 0], sizes = [1, 256], strides = [1, 1]} : vector<4x256xf32> to vector<1x256xf32>
    %217 = vector.broadcast %215 : vector<4x1xf32> to vector<4x256xf32>
    %218 = vector.broadcast %216 : vector<1x256xf32> to vector<4x256xf32>
    %219 = arith.mulf %217, %218 : vector<4x256xf32>
    %220 = arith.addf %214, %219 : vector<4x256xf32>
    %221 = vector.extract_strided_slice %90 {offsets = [0, 21], sizes = [4, 1], strides = [1, 1]} : vector<4x36xf32> to vector<4x1xf32>
    %222 = vector.extract_strided_slice %72 {offsets = [1, 0], sizes = [1, 256], strides = [1, 1]} : vector<4x256xf32> to vector<1x256xf32>
    %223 = vector.broadcast %221 : vector<4x1xf32> to vector<4x256xf32>
    %224 = vector.broadcast %222 : vector<1x256xf32> to vector<4x256xf32>
    %225 = arith.mulf %223, %224 : vector<4x256xf32>
    %226 = arith.addf %220, %225 : vector<4x256xf32>
    %227 = vector.extract_strided_slice %90 {offsets = [0, 22], sizes = [4, 1], strides = [1, 1]} : vector<4x36xf32> to vector<4x1xf32>
    %228 = vector.extract_strided_slice %72 {offsets = [2, 0], sizes = [1, 256], strides = [1, 1]} : vector<4x256xf32> to vector<1x256xf32>
    %229 = vector.broadcast %227 : vector<4x1xf32> to vector<4x256xf32>
    %230 = vector.broadcast %228 : vector<1x256xf32> to vector<4x256xf32>
    %231 = arith.mulf %229, %230 : vector<4x256xf32>
    %232 = arith.addf %226, %231 : vector<4x256xf32>
    %233 = vector.extract_strided_slice %90 {offsets = [0, 23], sizes = [4, 1], strides = [1, 1]} : vector<4x36xf32> to vector<4x1xf32>
    %234 = vector.extract_strided_slice %72 {offsets = [3, 0], sizes = [1, 256], strides = [1, 1]} : vector<4x256xf32> to vector<1x256xf32>
    %235 = vector.broadcast %233 : vector<4x1xf32> to vector<4x256xf32>
    %236 = vector.broadcast %234 : vector<1x256xf32> to vector<4x256xf32>
    %237 = arith.mulf %235, %236 : vector<4x256xf32>
    %238 = arith.addf %232, %237 : vector<4x256xf32>
    %239 = vector.extract_strided_slice %90 {offsets = [0, 24], sizes = [4, 1], strides = [1, 1]} : vector<4x36xf32> to vector<4x1xf32>
    %240 = vector.extract_strided_slice %82 {offsets = [0, 0], sizes = [1, 256], strides = [1, 1]} : vector<4x256xf32> to vector<1x256xf32>
    %241 = vector.broadcast %239 : vector<4x1xf32> to vector<4x256xf32>
    %242 = vector.broadcast %240 : vector<1x256xf32> to vector<4x256xf32>
    %243 = arith.mulf %241, %242 : vector<4x256xf32>
    %244 = arith.addf %238, %243 : vector<4x256xf32>
    %245 = vector.extract_strided_slice %90 {offsets = [0, 25], sizes = [4, 1], strides = [1, 1]} : vector<4x36xf32> to vector<4x1xf32>
    %246 = vector.extract_strided_slice %82 {offsets = [1, 0], sizes = [1, 256], strides = [1, 1]} : vector<4x256xf32> to vector<1x256xf32>
    %247 = vector.broadcast %245 : vector<4x1xf32> to vector<4x256xf32>
    %248 = vector.broadcast %246 : vector<1x256xf32> to vector<4x256xf32>
    %249 = arith.mulf %247, %248 : vector<4x256xf32>
    %250 = arith.addf %244, %249 : vector<4x256xf32>
    %251 = vector.extract_strided_slice %90 {offsets = [0, 26], sizes = [4, 1], strides = [1, 1]} : vector<4x36xf32> to vector<4x1xf32>
    %252 = vector.extract_strided_slice %82 {offsets = [2, 0], sizes = [1, 256], strides = [1, 1]} : vector<4x256xf32> to vector<1x256xf32>
    %253 = vector.broadcast %251 : vector<4x1xf32> to vector<4x256xf32>
    %254 = vector.broadcast %252 : vector<1x256xf32> to vector<4x256xf32>
    %255 = arith.mulf %253, %254 : vector<4x256xf32>
    %256 = arith.addf %250, %255 : vector<4x256xf32>
    %257 = vector.extract_strided_slice %90 {offsets = [0, 27], sizes = [4, 1], strides = [1, 1]} : vector<4x36xf32> to vector<4x1xf32>
    %258 = vector.extract_strided_slice %82 {offsets = [3, 0], sizes = [1, 256], strides = [1, 1]} : vector<4x256xf32> to vector<1x256xf32>
    %259 = vector.broadcast %257 : vector<4x1xf32> to vector<4x256xf32>
    %260 = vector.broadcast %258 : vector<1x256xf32> to vector<4x256xf32>
    %261 = arith.mulf %259, %260 : vector<4x256xf32>
    %262 = arith.addf %256, %261 : vector<4x256xf32>
    %263 = vector.extract_strided_slice %90 {offsets = [0, 28], sizes = [4, 1], strides = [1, 1]} : vector<4x36xf32> to vector<4x1xf32>
    %264 = vector.extract_strided_slice %44 {offsets = [0, 0], sizes = [1, 256], strides = [1, 1]} : vector<4x256xf32> to vector<1x256xf32>
    %265 = vector.broadcast %263 : vector<4x1xf32> to vector<4x256xf32>
    %266 = vector.broadcast %264 : vector<1x256xf32> to vector<4x256xf32>
    %267 = arith.mulf %265, %266 : vector<4x256xf32>
    %268 = arith.addf %262, %267 : vector<4x256xf32>
    %269 = vector.extract_strided_slice %90 {offsets = [0, 29], sizes = [4, 1], strides = [1, 1]} : vector<4x36xf32> to vector<4x1xf32>
    %270 = vector.extract_strided_slice %44 {offsets = [1, 0], sizes = [1, 256], strides = [1, 1]} : vector<4x256xf32> to vector<1x256xf32>
    %271 = vector.broadcast %269 : vector<4x1xf32> to vector<4x256xf32>
    %272 = vector.broadcast %270 : vector<1x256xf32> to vector<4x256xf32>
    %273 = arith.mulf %271, %272 : vector<4x256xf32>
    %274 = arith.addf %268, %273 : vector<4x256xf32>
    %275 = vector.extract_strided_slice %90 {offsets = [0, 30], sizes = [4, 1], strides = [1, 1]} : vector<4x36xf32> to vector<4x1xf32>
    %276 = vector.extract_strided_slice %44 {offsets = [2, 0], sizes = [1, 256], strides = [1, 1]} : vector<4x256xf32> to vector<1x256xf32>
    %277 = vector.broadcast %275 : vector<4x1xf32> to vector<4x256xf32>
    %278 = vector.broadcast %276 : vector<1x256xf32> to vector<4x256xf32>
    %279 = arith.mulf %277, %278 : vector<4x256xf32>
    %280 = arith.addf %274, %279 : vector<4x256xf32>
    %281 = vector.extract_strided_slice %90 {offsets = [0, 31], sizes = [4, 1], strides = [1, 1]} : vector<4x36xf32> to vector<4x1xf32>
    %282 = vector.extract_strided_slice %44 {offsets = [3, 0], sizes = [1, 256], strides = [1, 1]} : vector<4x256xf32> to vector<1x256xf32>
    %283 = vector.broadcast %281 : vector<4x1xf32> to vector<4x256xf32>
    %284 = vector.broadcast %282 : vector<1x256xf32> to vector<4x256xf32>
    %285 = arith.mulf %283, %284 : vector<4x256xf32>
    %286 = arith.addf %280, %285 : vector<4x256xf32>
    %287 = vector.extract_strided_slice %90 {offsets = [0, 32], sizes = [4, 1], strides = [1, 1]} : vector<4x36xf32> to vector<4x1xf32>
    %288 = vector.extract_strided_slice %86 {offsets = [0, 0], sizes = [1, 256], strides = [1, 1]} : vector<4x256xf32> to vector<1x256xf32>
    %289 = vector.broadcast %287 : vector<4x1xf32> to vector<4x256xf32>
    %290 = vector.broadcast %288 : vector<1x256xf32> to vector<4x256xf32>
    %291 = arith.mulf %289, %290 : vector<4x256xf32>
    %292 = arith.addf %286, %291 : vector<4x256xf32>
    %293 = vector.extract_strided_slice %90 {offsets = [0, 33], sizes = [4, 1], strides = [1, 1]} : vector<4x36xf32> to vector<4x1xf32>
    %294 = vector.extract_strided_slice %86 {offsets = [1, 0], sizes = [1, 256], strides = [1, 1]} : vector<4x256xf32> to vector<1x256xf32>
    %295 = vector.broadcast %293 : vector<4x1xf32> to vector<4x256xf32>
    %296 = vector.broadcast %294 : vector<1x256xf32> to vector<4x256xf32>
    %297 = arith.mulf %295, %296 : vector<4x256xf32>
    %298 = arith.addf %292, %297 : vector<4x256xf32>
    %299 = vector.extract_strided_slice %90 {offsets = [0, 34], sizes = [4, 1], strides = [1, 1]} : vector<4x36xf32> to vector<4x1xf32>
    %300 = vector.extract_strided_slice %86 {offsets = [2, 0], sizes = [1, 256], strides = [1, 1]} : vector<4x256xf32> to vector<1x256xf32>
    %301 = vector.broadcast %299 : vector<4x1xf32> to vector<4x256xf32>
    %302 = vector.broadcast %300 : vector<1x256xf32> to vector<4x256xf32>
    %303 = arith.mulf %301, %302 : vector<4x256xf32>
    %304 = arith.addf %298, %303 : vector<4x256xf32>
    %305 = vector.extract_strided_slice %90 {offsets = [0, 35], sizes = [4, 1], strides = [1, 1]} : vector<4x36xf32> to vector<4x1xf32>
    %306 = vector.extract_strided_slice %86 {offsets = [3, 0], sizes = [1, 256], strides = [1, 1]} : vector<4x256xf32> to vector<1x256xf32>
    %307 = vector.broadcast %305 : vector<4x1xf32> to vector<4x256xf32>
    %308 = vector.broadcast %306 : vector<1x256xf32> to vector<4x256xf32>
    %309 = arith.mulf %307, %308 : vector<4x256xf32>
    %310 = arith.addf %304, %309 : vector<4x256xf32>
    %cst_28 = arith.constant 0.000000e+00 : f32
    %311 = vector.broadcast %cst_28 : f32 to vector<4x256xf32>
    %312 = arith.maximumf %310, %311 : vector<4x256xf32>
    %c0_29 = arith.constant 0 : index
    %c4 = arith.constant 4 : index
    %c0_30 = arith.constant 0 : index
    %313 = vector.load %arg7[%c0_29, %c4, %c0_30] : memref<1x8x256xf32, #tpu.memory_space<vmem>>, vector<1x4x256xf32>
    %314 = vector.shape_cast %313 : vector<1x4x256xf32> to vector<4x256xf32>
    %315 = vector.shape_cast %312 : vector<4x256xf32> to vector<1x4x256xf32>
    tpu.vector_store %arg7[%c0_29, %c4, %c0_30], %315 {strides = array<i32>} : memref<1x8x256xf32, #tpu.memory_space<vmem>>, vector<1x4x256xf32>,
    return
  }
  func.func @transform_0(%arg0: i32, %arg1: i32) -> (i32, i32, i32) {
    %c0_i32 = arith.constant 0 : i32
    %c0_i32_0 = arith.constant 0 : i32
    return %arg0, %c0_i32, %arg1 : i32, i32, i32
  }
  func.func @transform_1(%arg0: i32, %arg1: i32) -> (i32, i32, i32) {
    %c2_i32 = arith.constant 2 : i32
    %0 = arith.muli %arg1, %c2_i32 : i32
    %c1_i32 = arith.constant 1 : i32
    %1 = arith.subi %0, %c1_i32 : i32
    %c0_i32 = arith.constant 0 : i32
    %2 = arith.maxsi %1, %c0_i32 : i32
    %c0_i32_0 = arith.constant 0 : i32
    %c0_i32_1 = arith.constant 0 : i32
    return %arg0, %c0_i32_0, %2 : i32, i32, i32
  }
  func.func @transform_2(%arg0: i32, %arg1: i32) -> (i32, i32, i32) {
    %c1_i32 = arith.constant 1 : i32
    %0 = arith.addi %arg1, %c1_i32 : i32
    %c2_i32 = arith.constant 2 : i32
    %1 = arith.muli %0, %c2_i32 : i32
    %c1_i32_0 = arith.constant 1 : i32
    %2 = arith.minsi %1, %c1_i32_0 : i32
    %c0_i32 = arith.constant 0 : i32
    %c0_i32_1 = arith.constant 0 : i32
    return %arg0, %c0_i32, %2 : i32, i32, i32
  }
  func.func @transform_3(%arg0: i32, %arg1: i32) -> (i32, i32) {
    %c0_i32 = arith.constant 0 : i32
    %c0_i32_0 = arith.constant 0 : i32
    %c0_i32_1 = arith.constant 0 : i32
    return %c0_i32, %c0_i32_0 : i32, i32
  }
  func.func @transform_4(%arg0: i32, %arg1: i32) -> (i32, i32) {
    %c0_i32 = arith.constant 0 : i32
    %c0_i32_0 = arith.constant 0 : i32
    %c0_i32_1 = arith.constant 0 : i32
    return %c0_i32, %c0_i32_0 : i32, i32
  }
  func.func @transform_5(%arg0: i32, %arg1: i32) -> (i32, i32, i32) {
    %c0_i32 = arith.constant 0 : i32
    %c0_i32_0 = arith.constant 0 : i32
    return %arg0, %c0_i32, %arg1 : i32, i32, i32
  }
}

</mosaic_0001>

<llo_original>
// kernel: forward.1
$region0: #{forward.1}
  #allocation0 [shape = 'u32[]', space=smem, size = 0x4, offset = 0x4, fixed_abs, tag = 'smem constant byte address 0x4 - core index']
  #allocation1 [shape = 'u32[144,128]{1,0:T(1,128)}', space=vmem, size = 0x12000, scoped, tag = 'internal scratch']
  %s0 = inlined_call_operand.vmem [shape: f32[2,4,256], index: 0, kind: input, shape index: {}, may-alias: {0,1,2}]
  %s1 = inlined_call_operand.vmem [shape: f32[2,4,256], index: 1, kind: input, shape index: {}, may-alias: {0,1,2}]
  %s2 = inlined_call_operand.vmem [shape: f32[2,4,256], index: 2, kind: input, shape index: {}, may-alias: {0,1,2}]
  %s3 = inlined_call_operand.vmem [shape: f32[4,36], index: 3, kind: input, shape index: {}]
  %s4 = inlined_call_operand.vmem [shape: f32[4,1], index: 4, kind: input, shape index: {}]
  %s5 = inlined_call_operand.vmem [shape: f32[2,8,256], index: 5, kind: output, shape index: {}]
  %s6 = sld [smem:[#allocation0]]
  $region53: #{forward.1} parent=0
    _
  %s8 = ssub.s32 1, %s6
  %s9 = scalar_select 0, %s8, %s6
  loop: start=0, step=1, limit=4
  $region2: #{forward.1} parent=0 // loop_pre_header
    _
  $region3: #{forward.1} parent=0 // loop_header
    %s11 = sphi 0, %s15
    %p12 = scmp.ge.s32.totalorder %s11, 4
    %s18 = sphi 0, %s30
    %s19 = sphi 0, %s26
    %s20 = sphi 0, %s18
    %s21 = sphi 0, %s19
    %s22 = sphi 0, %s20
    %s23 = sphi 0, %s21
    %s35 = sphi 0, %s37
    %s38 = sphi 0, %s35
    %s39 = sphi 0, %s38
    %s55 = sphi 0, %s39
    %s71 = sphi 0, %s73
    %s74 = sphi 0, %s71
    %s75 = sphi 0, %s74
    %s91 = sphi 0, %s75
    %s107 = sphi 0, %s109
    %s110 = sphi 0, %s107
    %s111 = sphi 0, %s110
    %s127 = sphi 0, %s111
    %s131 = sphi 0, %s131
    %s133 = sphi 0, %s131
    %s134 = sphi 0, %s133
    %s148 = sphi 0, %s134
    %s152 = sphi 0, %s152
    %s154 = sphi 0, %s152
    %s155 = sphi 0, %s154
    %s169 = sphi 0, %s155
    %s177 = sphi 0, %s179
    %s180 = sphi 0, %s177
    %s181 = sphi 0, %s180
    %s197 = sphi 0, %s181
  $region4: #{forward.1} parent=0 // loop_header_branch
    %14 = sbr.rel (%p12) target = $region8
  $region5: #{forward.1} parent=0 // loop_body
    %s16 = ssub.s32 %s11, 1
    %s17 = ssub.s32 %s11, 2
    %s24 = sadd.s32 1, %s19
    %p25 = scmp.ge.s32.totalorder %s24, 1
    %s26 = scalar_select %p25, 0, %s24
    %s27 = sadd.s32 1, %s18
    %s28 = scalar_select %p25, %s27, %s18
    %p29 = scmp.ge.s32.totalorder %s28, 2
    %s30 = scalar_select %p29, 0, %s28
    %s31 = ssub.s32 %s18, %s30
    %s32 = ssub.s32 %s19, %s26
    %s33 = sor.u32 %s31, %s32
    %p34 = scmp.eq.s32.totalorder %s33, 0
    %s36 = sadd.s32 %s35, 1
    %s37 = scalar_select %p34, %s35, %s36
    %p40 = pneg %p34
    %p41 = scmp.eq.s32.totalorder %s11, 1
    %p42 = por %p40, %p41
    %p43 = scmp.ne.s32.totalorder %s35, %s38
    %p44 = scmp.eq.s32.totalorder %s11, 0
    %p45 = por %p43, %p44
    %p46 = scmp.ne.s32.totalorder %s35, %s38
    %p47 = scmp.eq.s32.totalorder %s16, 1
    %p48 = por %p46, %p47
    %p49 = scmp.ne.s32.totalorder %s38, %s39
    %p50 = scmp.eq.s32.totalorder %s16, 0
    %p51 = por %p49, %p50
    %p52 = scmp.ne.s32.totalorder %s38, %s39
    %p53 = scmp.eq.s32.totalorder %s17, 1
    %p54 = por %p52, %p53
    %p56 = scmp.ne.s32.totalorder %s39, %s55
    %p57 = scmp.eq.s32.totalorder %s17, 0
    %p58 = por %p56, %p57
    %s59 = smul.u32 %s19, 2
    %s60 = ssub.s32 %s59, 1
    %p61 = scmp.gt.s32.totalorder %s60, 0
    %s62 = scalar_select %p61, %s60, 0
    %s63 = smul.u32 %s26, 2
    %s64 = ssub.s32 %s63, 1
    %p65 = scmp.gt.s32.totalorder %s64, 0
    %s66 = scalar_select %p65, %s64, 0
    %s67 = ssub.s32 %s18, %s30
    %s68 = ssub.s32 %s62, %s66
    %s69 = sor.u32 %s67, %s68
    %p70 = scmp.eq.s32.totalorder %s69, 0
    %s72 = sadd.s32 %s71, 1
    %s73 = scalar_select %p70, %s71, %s72
    %p76 = pneg %p70
    %p77 = scmp.eq.s32.totalorder %s11, 1
    %p78 = por %p76, %p77
    %p79 = scmp.ne.s32.totalorder %s71, %s74
    %p80 = scmp.eq.s32.totalorder %s11, 0
    %p81 = por %p79, %p80
    %p82 = scmp.ne.s32.totalorder %s71, %s74
    %p83 = scmp.eq.s32.totalorder %s16, 1
    %p84 = por %p82, %p83
    %p85 = scmp.ne.s32.totalorder %s74, %s75
    %p86 = scmp.eq.s32.totalorder %s16, 0
    %p87 = por %p85, %p86
    %p88 = scmp.ne.s32.totalorder %s74, %s75
    %p89 = scmp.eq.s32.totalorder %s17, 1
    %p90 = por %p88, %p89
    %p92 = scmp.ne.s32.totalorder %s75, %s91
    %p93 = scmp.eq.s32.totalorder %s17, 0
    %p94 = por %p92, %p93
    %s95 = sadd.s32 %s19, 1
    %s96 = smul.u32 %s95, 2
    %p97 = scmp.lt.s32.totalorder %s96, 1
    %s98 = scalar_select %p97, %s96, 1
    %s99 = sadd.s32 %s26, 1
    %s100 = smul.u32 %s99, 2
    %p101 = scmp.lt.s32.totalorder %s100, 1
    %s102 = scalar_select %p101, %s100, 1
    %s103 = ssub.s32 %s18, %s30
    %s104 = ssub.s32 %s98, %s102
    %s105 = sor.u32 %s103, %s104
    %p106 = scmp.eq.s32.totalorder %s105, 0
    %s108 = sadd.s32 %s107, 1
    %s109 = scalar_select %p106, %s107, %s108
    %p112 = pneg %p106
    %p113 = scmp.eq.s32.totalorder %s11, 1
    %p114 = por %p112, %p113
    %p115 = scmp.ne.s32.totalorder %s107, %s110
    %p116 = scmp.eq.s32.totalorder %s11, 0
    %p117 = por %p115, %p116
    %p118 = scmp.ne.s32.totalorder %s107, %s110
    %p119 = scmp.eq.s32.totalorder %s16, 1
    %p120 = por %p118, %p119
    %p121 = scmp.ne.s32.totalorder %s110, %s111
    %p122 = scmp.eq.s32.totalorder %s16, 0
    %p123 = por %p121, %p122
    %p124 = scmp.ne.s32.totalorder %s110, %s111
    %p125 = scmp.eq.s32.totalorder %s17, 1
    %p126 = por %p124, %p125
    %p128 = scmp.ne.s32.totalorder %s111, %s127
    %p129 = scmp.eq.s32.totalorder %s17, 0
    %p130 = por %p128, %p129
    %s132 = sadd.s32 %s131, 1
    %p135 = scmp.eq.s32.totalorder %s11, 1
    %p136 = scmp.ne.s32.totalorder %s131, %s133
    %p137 = scmp.eq.s32.totalorder %s11, 0
    %p138 = por %p136, %p137
    %p139 = scmp.ne.s32.totalorder %s131, %s133
    %p140 = scmp.eq.s32.totalorder %s16, 1
    %p141 = por %p139, %p140
    %p142 = scmp.ne.s32.totalorder %s133, %s134
    %p143 = scmp.eq.s32.totalorder %s16, 0
    %p144 = por %p142, %p143
    %p145 = scmp.ne.s32.totalorder %s133, %s134
    %p146 = scmp.eq.s32.totalorder %s17, 1
    %p147 = por %p145, %p146
    %p149 = scmp.ne.s32.totalorder %s134, %s148
    %p150 = scmp.eq.s32.totalorder %s17, 0
    %p151 = por %p149, %p150
    %s153 = sadd.s32 %s152, 1
    %p156 = scmp.eq.s32.totalorder %s11, 1
    %p157 = scmp.ne.s32.totalorder %s152, %s154
    %p158 = scmp.eq.s32.totalorder %s11, 0
    %p159 = por %p157, %p158
    %p160 = scmp.ne.s32.totalorder %s152, %s154
    %p161 = scmp.eq.s32.totalorder %s16, 1
    %p162 = por %p160, %p161
    %p163 = scmp.ne.s32.totalorder %s154, %s155
    %p164 = scmp.eq.s32.totalorder %s16, 0
    %p165 = por %p163, %p164
    %p166 = scmp.ne.s32.totalorder %s154, %s155
    %p167 = scmp.eq.s32.totalorder %s17, 1
    %p168 = por %p166, %p167
    %p170 = scmp.ne.s32.totalorder %s155, %s169
    %p171 = scmp.eq.s32.totalorder %s17, 0
    %p172 = por %p170, %p171
    %s173 = ssub.s32 %s18, %s30
    %s174 = ssub.s32 %s19, %s26
    %s175 = sor.u32 %s173, %s174
    %p176 = scmp.eq.s32.totalorder %s175, 0
    %s178 = sadd.s32 %s177, 1
    %s179 = scalar_select %p176, %s177, %s178
    %p182 = pneg %p176
    %p183 = scmp.eq.s32.totalorder %s11, 1
    %p184 = por %p182, %p183
    %p185 = scmp.ne.s32.totalorder %s177, %s180
    %p186 = scmp.eq.s32.totalorder %s11, 0
    %p187 = por %p185, %p186
    %p188 = scmp.ne.s32.totalorder %s177, %s180
    %p189 = scmp.eq.s32.totalorder %s16, 1
    %p190 = por %p188, %p189
    %p191 = scmp.ne.s32.totalorder %s180, %s181
    %p192 = scmp.eq.s32.totalorder %s16, 0
    %p193 = por %p191, %p192
    %p194 = scmp.ne.s32.totalorder %s180, %s181
    %p195 = scmp.eq.s32.totalorder %s17, 1
    %p196 = por %p194, %p195
    %p198 = scmp.ne.s32.totalorder %s181, %s197
    %p199 = scmp.eq.s32.totalorder %s17, 0
    %p200 = por %p198, %p199
    %p201 = scmp.le.s32.totalorder 1, %s11
    %p202 = scmp.lt.s32.totalorder %s11, 3
    %p203 = pnand %p201, %p202
    %p204 = pneg %p203
    // Predicated region
    $region9: #{forward.1} parent=5 // pred_check
      _
    $region10: #{forward.1} parent=5 // pred_check_branch
      %206 = sbr.rel (%p203) target = $region12
    $region11: #{forward.1} parent=5 // pred_region
      %s207 = ssub.s32 %s11, 1
      // Predicated region
      $region13: #{forward.1} parent=11 // pred_check
        %p208 = pneg %p144
      $region14: #{forward.1} parent=11 // pred_check_branch
        %210 = sbr.rel (%p208) target = $region16
      $region15: #{forward.1} parent=11 // pred_region
        _
      $region16: #{forward.1} parent=11 // pred_fallthru
        _
      // Predicated region
      $region17: #{forward.1} parent=11 // pred_check
        %p211 = pneg %p165
      $region18: #{forward.1} parent=11 // pred_check_branch
        %213 = sbr.rel (%p211) target = $region20
      $region19: #{forward.1} parent=11 // pred_region
        _
      $region20: #{forward.1} parent=11 // pred_fallthru
        _
    $region12: #{forward.1} parent=5 // pred_fallthru
      _
    %p214 = scmp.lt.s32.totalorder %s11, 2
    // Predicated region
    $region21: #{forward.1} parent=5 // pred_check
      %p215 = pneg %p214
    $region22: #{forward.1} parent=5 // pred_check_branch
      %217 = sbr.rel (%p215) target = $region24
    $region23: #{forward.1} parent=5 // pred_region
      // Predicated region
      $region25: #{forward.1} parent=23 // pred_check
        %p218 = pneg %p45
      $region26: #{forward.1} parent=23 // pred_check_branch
        %220 = sbr.rel (%p218) target = $region28
      $region27: #{forward.1} parent=23 // pred_region
        %s221 = smul.u32 2, %s19
        %p222 = scmp.lt.s32.totalorder %s18, 1
        %s223 = scalar_select %p222, %s18, 1
        %p224 = scmp.lt.s32.totalorder %s221, 1
        %s225 = scalar_select %p224, %s221, 1
        %s226 = smul.addr %s223, 2
        %s227 = sadd.s32 %s225, %s226
        %s228 = smul.addr %s227, 4
        %s229 = scalar_lea.vmem %s0, %s228
        %s230 = smul.u32 2, %s19
      $region28: #{forward.1} parent=23 // pred_fallthru
        _
      // Predicated region
      $region29: #{forward.1} parent=23 // pred_check
        %p231 = pneg %p81
      $region30: #{forward.1} parent=23 // pred_check_branch
        %233 = sbr.rel (%p231) target = $region32
      $region31: #{forward.1} parent=23 // pred_region
        %s234 = smul.u32 %s19, 2
        %s235 = ssub.s32 %s234, 1
        %p236 = scmp.gt.s32.totalorder %s235, 0
        %s237 = scalar_select %p236, %s235, 0
        %p238 = scmp.lt.s32.totalorder %s18, 1
        %s239 = scalar_select %p238, %s18, 1
        %p240 = scmp.lt.s32.totalorder %s237, 1
        %s241 = scalar_select %p240, %s237, 1
        %s242 = smul.addr %s239, 2
        %s243 = sadd.s32 %s241, %s242
        %s244 = smul.addr %s243, 4
        %s245 = scalar_lea.vmem %s1, %s244
        %s246 = smul.u32 %s19, 2
        %s247 = ssub.s32 %s246, 1
        %p248 = scmp.gt.s32.totalorder %s247, 0
        %s249 = scalar_select %p248, %s247, 0
      $region32: #{forward.1} parent=23 // pred_fallthru
        _
      // Predicated region
      $region33: #{forward.1} parent=23 // pred_check
        %p250 = pneg %p117
      $region34: #{forward.1} parent=23 // pred_check_branch
        %252 = sbr.rel (%p250) target = $region36
      $region35: #{forward.1} parent=23 // pred_region
        %s253 = sadd.s32 %s19, 1
        %s254 = smul.u32 %s253, 2
        %p255 = scmp.lt.s32.totalorder %s254, 1
        %s256 = scalar_select %p255, %s254, 1
        %p257 = scmp.lt.s32.totalorder %s18, 1
        %s258 = scalar_select %p257, %s18, 1
        %p259 = scmp.lt.s32.totalorder %s256, 1
        %s260 = scalar_select %p259, %s256, 1
        %s261 = smul.addr %s258, 2
        %s262 = sadd.s32 %s260, %s261
        %s263 = smul.addr %s262, 4
        %s264 = scalar_lea.vmem %s2, %s263
        %s265 = sadd.s32 %s19, 1
        %s266 = smul.u32 %s265, 2
        %p267 = scmp.lt.s32.totalorder %s266, 1
        %s268 = scalar_select %p267, %s266, 1
      $region36: #{forward.1} parent=23 // pred_fallthru
        _
    $region24: #{forward.1} parent=5 // pred_fallthru
      _
    %p269 = scmp.le.s32.totalorder 1, %s11
    %p270 = scmp.lt.s32.totalorder %s11, 3
    %p271 = pnand %p269, %p270
    %p272 = pneg %p271
    // Predicated region
    $region37: #{forward.1} parent=5 // pred_check
      _
    $region38: #{forward.1} parent=5 // pred_check_branch
      %274 = sbr.rel (%p271) target = $region40
    $region39: #{forward.1} parent=5 // pred_region
      %s275 = ssub.s32 %s11, 1
      %s276 = smul.u32 2, %s21
      %p277 = scmp.lt.s32.totalorder %s20, 1
      %s278 = scalar_select %p277, %s20, 1
      %p279 = scmp.lt.s32.totalorder %s276, 1
      %s280 = scalar_select %p279, %s276, 1
      %s281 = smul.addr %s278, 2
      %s282 = sadd.s32 %s280, %s281
      %s283 = smul.addr %s282, 4
      %s284 = scalar_lea.vmem %s0, %s283
      %p285 = pneg %p51
      %p286 = pneg %p48
      %s287 = smul.u32 %s21, 2
      %s288 = ssub.s32 %s287, 1
      %p289 = scmp.gt.s32.totalorder %s288, 0
      %s290 = scalar_select %p289, %s288, 0
      %p291 = scmp.lt.s32.totalorder %s20, 1
      %s292 = scalar_select %p291, %s20, 1
      %p293 = scmp.lt.s32.totalorder %s290, 1
      %s294 = scalar_select %p293, %s290, 1
      %s295 = smul.addr %s292, 2
      %s296 = sadd.s32 %s294, %s295
      %s297 = smul.addr %s296, 4
      %s298 = scalar_lea.vmem %s1, %s297
      %p299 = pneg %p87
      %p300 = pneg %p84
      %s301 = sadd.s32 %s21, 1
      %s302 = smul.u32 %s301, 2
      %p303 = scmp.lt.s32.totalorder %s302, 1
      %s304 = scalar_select %p303, %s302, 1
      %p305 = scmp.lt.s32.totalorder %s20, 1
      %s306 = scalar_select %p305, %s20, 1
      %p307 = scmp.lt.s32.totalorder %s304, 1
      %s308 = scalar_select %p307, %s304, 1
      %s309 = smul.addr %s306, 2
      %s310 = sadd.s32 %s308, %s309
      %s311 = smul.addr %s310, 4
      %s312 = scalar_lea.vmem %s2, %s311
      %p313 = pneg %p123
      %p314 = pneg %p120
      %p315 = pneg %p144
      %p316 = pneg %p141
      %p317 = pneg %p165
      %p318 = pneg %p162
      %p319 = pneg %p193
      %p320 = pneg %p190
      %s321 = smul.u32 2, %s21
      %p322 = scmp.lt.s32.totalorder %s20, 1
      %s323 = scalar_select %p322, %s20, 1
      %p324 = scmp.lt.s32.totalorder %s321, 1
      %s325 = scalar_select %p324, %s321, 1
      %s326 = smul.addr %s323, 2
      %s327 = sadd.s32 %s325, %s326
      %s328 = smul.addr %s327, 8
      %s329 = scalar_lea.vmem %s5, %s328
      %s330 = smul.u32 2, %s21
      %p331 = scmp.lt.s32.totalorder %s20, 1
      %s332 = scalar_select %p331, %s20, 1
      %p333 = scmp.lt.s32.totalorder %s330, 1
      %s334 = scalar_select %p333, %s330, 1
      %s335 = smul.addr %s332, 2
      %s336 = sadd.s32 %s334, %s335
      %s337 = smul.addr %s336, 4
      %s338 = scalar_lea.vmem %s0, %s337
      %s339 = smul.u32 2, %s21
      %s340 = smul.u32 %s21, 2
      %s341 = ssub.s32 %s340, 1
      %p342 = scmp.gt.s32.totalorder %s341, 0
      %s343 = scalar_select %p342, %s341, 0
      %p344 = scmp.lt.s32.totalorder %s20, 1
      %s345 = scalar_select %p344, %s20, 1
      %p346 = scmp.lt.s32.totalorder %s343, 1
      %s347 = scalar_select %p346, %s343, 1
      %s348 = smul.addr %s345, 2
      %s349 = sadd.s32 %s347, %s348
      %s350 = smul.addr %s349, 4
      %s351 = scalar_lea.vmem %s1, %s350
      %s352 = smul.u32 %s21, 2
      %s353 = ssub.s32 %s352, 1
      %p354 = scmp.gt.s32.totalorder %s353, 0
      %s355 = scalar_select %p354, %s353, 0
      %s356 = sadd.s32 %s21, 1
      %s357 = smul.u32 %s356, 2
      %p358 = scmp.lt.s32.totalorder %s357, 1
      %s359 = scalar_select %p358, %s357, 1
      %p360 = scmp.lt.s32.totalorder %s20, 1
      %s361 = scalar_select %p360, %s20, 1
      %p362 = scmp.lt.s32.totalorder %s359, 1
      %s363 = scalar_select %p362, %s359, 1
      %s364 = smul.addr %s361, 2
      %s365 = sadd.s32 %s363, %s364
      %s366 = smul.addr %s365, 4
      %s367 = scalar_lea.vmem %s2, %s366
      %s368 = sadd.s32 %s21, 1
      %s369 = smul.u32 %s368, 2
      %p370 = scmp.lt.s32.totalorder %s369, 1
      %s371 = scalar_select %p370, %s369, 1
      %s372 = smul.u32 2, %s21
      %p373 = scmp.lt.s32.totalorder %s20, 1
      %s374 = scalar_select %p373, %s20, 1
      %p375 = scmp.lt.s32.totalorder %s372, 1
      %s376 = scalar_select %p375, %s372, 1
      %s377 = smul.addr %s374, 2
      %s378 = sadd.s32 %s376, %s377
      %s379 = smul.addr %s378, 8
      %s380 = scalar_lea.vmem %s5, %s379
      %s381 = smul.u32 2, %s21
      %v382 = vld [vmem:[%s338] sm:$0xff]
      %v383 = vld [vmem:[%s351] sm:$0xf]
      %v384 = vld [vmem:[%s367] sm:$0xf]
      %386 = vrot.lane.b32.xlu0 %v383, 16
      %v387 = vpop.permute.xlu0 %386
      %v390 = vcombine.high %v382, %v382
      %391 = vrot.lane.b32.xlu0 %v382, 16
      %v392 = vpop.permute.xlu0 %391
      %393 = vrot.lane.b32.xlu0 %v390, 16
      %v394 = vpop.permute.xlu0 %393
      %vm395 = vcmask 130048
      %v396 = vsel %vm395, %v392, %v394
      %v399 = vsel %vm395, %v387, %v392
      %400 = vrot.lane.b32.xlu0 %v382, 112
      %v401 = vpop.permute.xlu0 %400
      %402 = vrot.lane.b32.xlu0 %v390, 112
      %v403 = vpop.permute.xlu0 %402
      %vm404 = vcmask 916480
      %v405 = vsel %vm404, %v401, %v403
      %409 = vrot.lane.b32.xlu0 %v384, 112
      %v410 = vpop.permute.xlu0 %409
      %v412 = vsel %vm404, %v403, %v410
      %v413 = vlaneseq
      %v414 = vand.u32 %v413, 127
      %v415 = vadd.s32 %v414, 128
      %vm416 = vcmp.lt.s32.totalorder %v414, 0
      %v417 = vsub.s32 0, %v414
      %v418 = vsel %vm416, %v417, %v414
      %v419 = vshrl.u32 %v418, 4
      %v420 = vand.u32 %v418, 15
      %v421 = vsub.s32 0, %v420
      %v422 = vsel %vm416, %v421, %v420
      %vm423 = vcmp.lt.s32.totalorder %v415, 0
      %v424 = vsub.s32 0, %v415
      %v425 = vsel %vm423, %v424, %v415
      %v426 = vshrl.u32 %v425, 4
      %v427 = vand.u32 %v425, 15
      %v428 = vsub.s32 0, %v427
      %v429 = vsel %vm423, %v428, %v427
      %vm430 = vcmp.ne.s32.totalorder %v422, 0
      %vm431 = vcmp.ne.s32.totalorder %v429, 0
      %vm432 = vcmp.lt.s32.totalorder %v422, 0
      %vm433 = vcmp.lt.s32.totalorder %v429, 0
      %vm434 = vmand %vm432, %vm430
      %vm435 = vmand %vm433, %vm431
      %v436 = vadd.s32 %v422, 16
      %v437 = vadd.s32 %v429, 16
      %v438 = vsel %vm434, %v436, %v422
      %v439 = vsel %vm435, %v437, %v429
      %vm440 = vcmp.ge.s32.totalorder %v438, 1
      %vm441 = vcmp.ge.s32.totalorder %v439, 1
      %vm442 = vcmp.lt.s32.totalorder %v438, 15
      %vm443 = vcmp.lt.s32.totalorder %v439, 15
      %vm444 = vcmp.ge.s32.totalorder %v414, 16
      %vm445 = vcmp.ge.s32.totalorder %v415, 16
      %v446 = vsel %vm444, 1, 0
      %v447 = vsel %vm445, 1, 0
      %vm448 = vcmp.eq.s32.totalorder %v446, 1
      %vm449 = vcmp.eq.s32.totalorder %v447, 1
      %v450 = vsel %vm448, %v399, 0.0
      %v451 = vsel %vm449, %v396, 0.0
      %vm452 = vcmp.lt.s32.totalorder %v414, 240
      %vm453 = vcmp.lt.s32.totalorder %v415, 240
      %v454 = vsel %vm452, 1, 0
      %v455 = vsel %vm453, 1, 0
      %vm456 = vcmp.eq.s32.totalorder %v454, 1
      %vm457 = vcmp.eq.s32.totalorder %v455, 1
      %v458 = vsel %vm456, %v405, 0.0
      %v459 = vsel %vm457, %v412, 0.0
      %462 = vrot.lane.b32.xlu0 %v450, 1
      %v463 = vpop.permute.xlu0 %462
      %464 = vrot.lane.b32.xlu0 %v451, 1
      %v465 = vpop.permute.xlu0 %464
      %vm466 = vcmask 7168
      %v467 = vsel %vm466, %v463, %v465
      %v470 = vsel %vm466, %v450, %v463
      %471 = vrot.lane.b32.xlu0 %v450, 127
      %v472 = vpop.permute.xlu0 %471
      %473 = vrot.lane.b32.xlu0 %v451, 127
      %v474 = vpop.permute.xlu0 %473
      %vm475 = vcmask 1039360
      %v476 = vsel %vm475, %v472, %v474
      %v479 = vsel %vm475, %v474, %v451
      %v480 = vsel %vm440, 1, 0
      %v481 = vsel %vm441, 1, 0
      %vm482 = vcmp.eq.s32.totalorder %v480, 1
      %vm483 = vcmp.eq.s32.totalorder %v481, 1
      %v484 = vsel %vm482, %v470, 0.0
      %v485 = vsel %vm483, %v467, 0.0
      %v486 = vsel %vm442, 1, 0
      %v487 = vsel %vm443, 1, 0
      %vm488 = vcmp.eq.s32.totalorder %v486, 1
      %vm489 = vcmp.eq.s32.totalorder %v487, 1
      %v490 = vsel %vm488, %v476, 0.0
      %v491 = vsel %vm489, %v479, 0.0
      %492 = vrot.lane.b32.xlu0 %v382, 1
      %v493 = vpop.permute.xlu0 %492
      %494 = vrot.lane.b32.xlu0 %v390, 1
      %v495 = vpop.permute.xlu0 %494
      %v496 = vsel %vm466, %v493, %v495
      %v499 = vsel %vm466, %v382, %v493
      %500 = vrot.lane.b32.xlu0 %v382, 127
      %v501 = vpop.permute.xlu0 %500
      %502 = vrot.lane.b32.xlu0 %v390, 127
      %v503 = vpop.permute.xlu0 %502
      %v504 = vsel %vm475, %v501, %v503
      %v508 = vsel %vm475, %v503, %v390
      %v509 = vsel %vm482, %v499, 0.0
      %v510 = vsel %vm483, %v496, 0.0
      %v511 = vsel %vm488, %v504, 0.0
      %v512 = vsel %vm489, %v508, 0.0
      %515 = vrot.lane.b32.xlu0 %v458, 1
      %v516 = vpop.permute.xlu0 %515
      %517 = vrot.lane.b32.xlu0 %v459, 1
      %v518 = vpop.permute.xlu0 %517
      %v519 = vsel %vm466, %v516, %v518
      %v522 = vsel %vm466, %v458, %v516
      %523 = vrot.lane.b32.xlu0 %v458, 127
      %v524 = vpop.permute.xlu0 %523
      %525 = vrot.lane.b32.xlu0 %v459, 127
      %v526 = vpop.permute.xlu0 %525
      %v527 = vsel %vm475, %v524, %v526
      %v530 = vsel %vm475, %v526, %v459
      %v531 = vsel %vm482, %v522, 0.0
      %v532 = vsel %vm483, %v519, 0.0
      %v533 = vsel %vm488, %v527, 0.0
      %v534 = vsel %vm489, %v530, 0.0
      %535 = vst [vmem:[%s380] sm:$0xf] %v382
      %536 = vst [vmem:[%s380 + $0x8] sm:$0xf] %v390
      %v537 = vld [vmem:[%s3] sm:$0xf]
      %v538 = vld [vmem:[%s4] sm:$0xf]
      %540 = vset.pattern.permute.xlu0 0
      %541 = vperm.xlu0 %540, %v538
      %v542 = vpop.permute.xlu0 %541
      %v544 = vadd.f32 %v542, 0.0
      %546 = vset.pattern.permute.xlu0 0
      %547 = vperm.xlu0 %546, %v537
      %v548 = vpop.permute.xlu0 %547
      %v550 = vlaneseq
      %v551 = vshrl.u32 %v550, 7
      %v552 = vsub.s32 0, %v551
      %v553 = vrot.slane %v484, %v552
      %v554 = vlaneseq
      %v555 = vshrl.u32 %v554, 7
      %v556 = vsub.s32 0, %v555
      %v557 = vrot.slane %v485, %v556
      %v558 = vmul.f32 %v548, %v553
      %v559 = vmul.f32 %v548, %v557
      %v560 = vadd.f32 %v544, %v558
      %v561 = vadd.f32 %v544, %v559
      %562 = vset.pattern.permute.xlu0 1
      %563 = vperm.xlu0 %562, %v537
      %v564 = vpop.permute.xlu0 %563
      %v566 = vlaneseq
      %v567 = vshrl.u32 %v566, 7
      %v568 = vsub.s32 1, %v567
      %v569 = vrot.slane %v484, %v568
      %v570 = vlaneseq
      %v571 = vshrl.u32 %v570, 7
      %v572 = vsub.s32 1, %v571
      %v573 = vrot.slane %v485, %v572
      %v574 = vmul.f32 %v564, %v569
      %v575 = vmul.f32 %v564, %v573
      %v576 = vadd.f32 %v560, %v574
      %v577 = vadd.f32 %v561, %v575
      %578 = vset.pattern.permute.xlu0 2
      %579 = vperm.xlu0 %578, %v537
      %v580 = vpop.permute.xlu0 %579
      %v582 = vlaneseq
      %v583 = vshrl.u32 %v582, 7
      %v584 = vsub.s32 2, %v583
      %v585 = vrot.slane %v484, %v584
      %v586 = vlaneseq
      %v587 = vshrl.u32 %v586, 7
      %v588 = vsub.s32 2, %v587
      %v589 = vrot.slane %v485, %v588
      %v590 = vmul.f32 %v580, %v585
      %v591 = vmul.f32 %v580, %v589
      %v592 = vadd.f32 %v576, %v590
      %v593 = vadd.f32 %v577, %v591
      %594 = vset.pattern.permute.xlu0 3
      %595 = vperm.xlu0 %594, %v537
      %v596 = vpop.permute.xlu0 %595
      %v598 = vlaneseq
      %v599 = vshrl.u32 %v598, 7
      %v600 = vsub.s32 3, %v599
      %v601 = vrot.slane %v484, %v600
      %v602 = vlaneseq
      %v603 = vshrl.u32 %v602, 7
      %v604 = vsub.s32 3, %v603
      %v605 = vrot.slane %v485, %v604
      %v606 = vmul.f32 %v596, %v601
      %v607 = vmul.f32 %v596, %v605
      %v608 = vadd.f32 %v592, %v606
      %v609 = vadd.f32 %v593, %v607
      %610 = vset.pattern.permute.xlu0 4
      %611 = vperm.xlu0 %610, %v537
      %v612 = vpop.permute.xlu0 %611
      %v614 = vlaneseq
      %v615 = vshrl.u32 %v614, 7
      %v616 = vsub.s32 0, %v615
      %v617 = vrot.slane %v450, %v616
      %v618 = vlaneseq
      %v619 = vshrl.u32 %v618, 7
      %v620 = vsub.s32 0, %v619
      %v621 = vrot.slane %v451, %v620
      %v622 = vmul.f32 %v612, %v617
      %v623 = vmul.f32 %v612, %v621
      %v624 = vadd.f32 %v608, %v622
      %v625 = vadd.f32 %v609, %v623
      %626 = vset.pattern.permute.xlu0 5
      %627 = vperm.xlu0 %626, %v537
      %v628 = vpop.permute.xlu0 %627
      %v630 = vlaneseq
      %v631 = vshrl.u32 %v630, 7
      %v632 = vsub.s32 1, %v631
      %v633 = vrot.slane %v450, %v632
      %v634 = vlaneseq
      %v635 = vshrl.u32 %v634, 7
      %v636 = vsub.s32 1, %v635
      %v637 = vrot.slane %v451, %v636
      %v638 = vmul.f32 %v628, %v633
      %v639 = vmul.f32 %v628, %v637
      %v640 = vadd.f32 %v624, %v638
      %v641 = vadd.f32 %v625, %v639
      %642 = vset.pattern.permute.xlu0 6
      %643 = vperm.xlu0 %642, %v537
      %v644 = vpop.permute.xlu0 %643
      %v646 = vlaneseq
      %v647 = vshrl.u32 %v646, 7
      %v648 = vsub.s32 2, %v647
      %v649 = vrot.slane %v450, %v648
      %v650 = vlaneseq
      %v651 = vshrl.u32 %v650, 7
      %v652 = vsub.s32 2, %v651
      %v653 = vrot.slane %v451, %v652
      %v654 = vmul.f32 %v644, %v649
      %v655 = vmul.f32 %v644, %v653
      %v656 = vadd.f32 %v640, %v654
      %v657 = vadd.f32 %v641, %v655
      %658 = vset.pattern.permute.xlu0 7
      %659 = vperm.xlu0 %658, %v537
      %v660 = vpop.permute.xlu0 %659
      %v662 = vlaneseq
      %v663 = vshrl.u32 %v662, 7
      %v664 = vsub.s32 3, %v663
      %v665 = vrot.slane %v450, %v664
      %v666 = vlaneseq
      %v667 = vshrl.u32 %v666, 7
      %v668 = vsub.s32 3, %v667
      %v669 = vrot.slane %v451, %v668
      %v670 = vmul.f32 %v660, %v665
      %v671 = vmul.f32 %v660, %v669
      %v672 = vadd.f32 %v656, %v670
      %v673 = vadd.f32 %v657, %v671
      %674 = vset.pattern.permute.xlu0 8
      %675 = vperm.xlu0 %674, %v537
      %v676 = vpop.permute.xlu0 %675
      %v678 = vlaneseq
      %v679 = vshrl.u32 %v678, 7
      %v680 = vsub.s32 0, %v679
      %v681 = vrot.slane %v490, %v680
      %v682 = vlaneseq
      %v683 = vshrl.u32 %v682, 7
      %v684 = vsub.s32 0, %v683
      %v685 = vrot.slane %v491, %v684
      %v686 = vmul.f32 %v676, %v681
      %v687 = vmul.f32 %v676, %v685
      %v688 = vadd.f32 %v672, %v686
      %v689 = vadd.f32 %v673, %v687
      %690 = vset.pattern.permute.xlu0 9
      %691 = vperm.xlu0 %690, %v537
      %v692 = vpop.permute.xlu0 %691
      %v694 = vlaneseq
      %v695 = vshrl.u32 %v694, 7
      %v696 = vsub.s32 1, %v695
      %v697 = vrot.slane %v490, %v696
      %v698 = vlaneseq
      %v699 = vshrl.u32 %v698, 7
      %v700 = vsub.s32 1, %v699
      %v701 = vrot.slane %v491, %v700
      %v702 = vmul.f32 %v692, %v697
      %v703 = vmul.f32 %v692, %v701
      %v704 = vadd.f32 %v688, %v702
      %v705 = vadd.f32 %v689, %v703
      %706 = vset.pattern.permute.xlu0 10
      %707 = vperm.xlu0 %706, %v537
      %v708 = vpop.permute.xlu0 %707
      %v710 = vlaneseq
      %v711 = vshrl.u32 %v710, 7
      %v712 = vsub.s32 2, %v711
      %v713 = vrot.slane %v490, %v712
      %v714 = vlaneseq
      %v715 = vshrl.u32 %v714, 7
      %v716 = vsub.s32 2, %v715
      %v717 = vrot.slane %v491, %v716
      %v718 = vmul.f32 %v708, %v713
      %v719 = vmul.f32 %v708, %v717
      %v720 = vadd.f32 %v704, %v718
      %v721 = vadd.f32 %v705, %v719
      %722 = vset.pattern.permute.xlu0 11
      %723 = vperm.xlu0 %722, %v537
      %v724 = vpop.permute.xlu0 %723
      %v726 = vlaneseq
      %v727 = vshrl.u32 %v726, 7
      %v728 = vsub.s32 3, %v727
      %v729 = vrot.slane %v490, %v728
      %v730 = vlaneseq
      %v731 = vshrl.u32 %v730, 7
      %v732 = vsub.s32 3, %v731
      %v733 = vrot.slane %v491, %v732
      %v734 = vmul.f32 %v724, %v729
      %v735 = vmul.f32 %v724, %v733
      %v736 = vadd.f32 %v720, %v734
      %v737 = vadd.f32 %v721, %v735
      %738 = vset.pattern.permute.xlu0 12
      %739 = vperm.xlu0 %738, %v537
      %v740 = vpop.permute.xlu0 %739
      %v742 = vlaneseq
      %v743 = vshrl.u32 %v742, 7
      %v744 = vsub.s32 0, %v743
      %v745 = vrot.slane %v509, %v744
      %v746 = vlaneseq
      %v747 = vshrl.u32 %v746, 7
      %v748 = vsub.s32 0, %v747
      %v749 = vrot.slane %v510, %v748
      %v750 = vmul.f32 %v740, %v745
      %v751 = vmul.f32 %v740, %v749
      %v752 = vadd.f32 %v736, %v750
      %v753 = vadd.f32 %v737, %v751
      %754 = vset.pattern.permute.xlu0 13
      %755 = vperm.xlu0 %754, %v537
      %v756 = vpop.permute.xlu0 %755
      %v758 = vlaneseq
      %v759 = vshrl.u32 %v758, 7
      %v760 = vsub.s32 1, %v759
      %v761 = vrot.slane %v509, %v760
      %v762 = vlaneseq
      %v763 = vshrl.u32 %v762, 7
      %v764 = vsub.s32 1, %v763
      %v765 = vrot.slane %v510, %v764
      %v766 = vmul.f32 %v756, %v761
      %v767 = vmul.f32 %v756, %v765
      %v768 = vadd.f32 %v752, %v766
      %v769 = vadd.f32 %v753, %v767
      %770 = vset.pattern.permute.xlu0 14
      %771 = vperm.xlu0 %770, %v537
      %v772 = vpop.permute.xlu0 %771
      %v774 = vlaneseq
      %v775 = vshrl.u32 %v774, 7
      %v776 = vsub.s32 2, %v775
      %v777 = vrot.slane %v509, %v776
      %v778 = vlaneseq
      %v779 = vshrl.u32 %v778, 7
      %v780 = vsub.s32 2, %v779
      %v781 = vrot.slane %v510, %v780
      %v782 = vmul.f32 %v772, %v777
      %v783 = vmul.f32 %v772, %v781
      %v784 = vadd.f32 %v768, %v782
      %v785 = vadd.f32 %v769, %v783
      %786 = vset.pattern.permute.xlu0 15
      %787 = vperm.xlu0 %786, %v537
      %v788 = vpop.permute.xlu0 %787
      %v790 = vlaneseq
      %v791 = vshrl.u32 %v790, 7
      %v792 = vsub.s32 3, %v791
      %v793 = vrot.slane %v509, %v792
      %v794 = vlaneseq
      %v795 = vshrl.u32 %v794, 7
      %v796 = vsub.s32 3, %v795
      %v797 = vrot.slane %v510, %v796
      %v798 = vmul.f32 %v788, %v793
      %v799 = vmul.f32 %v788, %v797
      %v800 = vadd.f32 %v784, %v798
      %v801 = vadd.f32 %v785, %v799
      %802 = vset.pattern.permute.xlu0 16
      %803 = vperm.xlu0 %802, %v537
      %v804 = vpop.permute.xlu0 %803
      %v806 = vlaneseq
      %v807 = vshrl.u32 %v806, 7
      %v808 = vsub.s32 0, %v807
      %v809 = vrot.slane %v382, %v808
      %v810 = vlaneseq
      %v811 = vshrl.u32 %v810, 7
      %v812 = vsub.s32 4, %v811
      %v813 = vrot.slane %v382, %v812
      %v816 = vlaneseq
      %v817 = vshrl.u32 %v816, 7
      %v818 = vsub.s32 0, %v817
      %v819 = vrot.slane %v809, %v818
      %v820 = vlaneseq
      %v821 = vshrl.u32 %v820, 7
      %v822 = vsub.s32 0, %v821
      %v823 = vrot.slane %v813, %v822
      %v824 = vmul.f32 %v804, %v819
      %v825 = vmul.f32 %v804, %v823
      %v826 = vadd.f32 %v800, %v824
      %v827 = vadd.f32 %v801, %v825
      %828 = vset.pattern.permute.xlu0 17
      %829 = vperm.xlu0 %828, %v537
      %v830 = vpop.permute.xlu0 %829
      %v832 = vlaneseq
      %v833 = vshrl.u32 %v832, 7
      %v834 = vsub.s32 1, %v833
      %v835 = vrot.slane %v382, %v834
      %v836 = vlaneseq
      %v837 = vshrl.u32 %v836, 7
      %v838 = vsub.s32 5, %v837
      %v839 = vrot.slane %v382, %v838
      %v842 = vlaneseq
      %v843 = vshrl.u32 %v842, 7
      %v844 = vsub.s32 1, %v843
      %v845 = vrot.slane %v835, %v844
      %v846 = vlaneseq
      %v847 = vshrl.u32 %v846, 7
      %v848 = vsub.s32 1, %v847
      %v849 = vrot.slane %v839, %v848
      %v850 = vmul.f32 %v830, %v845
      %v851 = vmul.f32 %v830, %v849
      %v852 = vadd.f32 %v826, %v850
      %v853 = vadd.f32 %v827, %v851
      %854 = vset.pattern.permute.xlu0 18
      %855 = vperm.xlu0 %854, %v537
      %v856 = vpop.permute.xlu0 %855
      %v858 = vlaneseq
      %v859 = vshrl.u32 %v858, 7
      %v860 = vsub.s32 2, %v859
      %v861 = vrot.slane %v382, %v860
      %v862 = vlaneseq
      %v863 = vshrl.u32 %v862, 7
      %v864 = vsub.s32 6, %v863
      %v865 = vrot.slane %v382, %v864
      %v868 = vlaneseq
      %v869 = vshrl.u32 %v868, 7
      %v870 = vsub.s32 2, %v869
      %v871 = vrot.slane %v861, %v870
      %v872 = vlaneseq
      %v873 = vshrl.u32 %v872, 7
      %v874 = vsub.s32 2, %v873
      %v875 = vrot.slane %v865, %v874
      %v876 = vmul.f32 %v856, %v871
      %v877 = vmul.f32 %v856, %v875
      %v878 = vadd.f32 %v852, %v876
      %v879 = vadd.f32 %v853, %v877
      %880 = vset.pattern.permute.xlu0 19
      %881 = vperm.xlu0 %880, %v537
      %v882 = vpop.permute.xlu0 %881
      %v884 = vlaneseq
      %v885 = vshrl.u32 %v884, 7
      %v886 = vsub.s32 3, %v885
      %v887 = vrot.slane %v382, %v886
      %v888 = vlaneseq
      %v889 = vshrl.u32 %v888, 7
      %v890 = vsub.s32 7, %v889
      %v891 = vrot.slane %v382, %v890
      %v894 = vlaneseq
      %v895 = vshrl.u32 %v894, 7
      %v896 = vsub.s32 3, %v895
      %v897 = vrot.slane %v887, %v896
      %v898 = vlaneseq
      %v899 = vshrl.u32 %v898, 7
      %v900 = vsub.s32 3, %v899
      %v901 = vrot.slane %v891, %v900
      %v902 = vmul.f32 %v882, %v897
      %v903 = vmul.f32 %v882, %v901
      %v904 = vadd.f32 %v878, %v902
      %v905 = vadd.f32 %v879, %v903
      %906 = vset.pattern.permute.xlu0 20
      %907 = vperm.xlu0 %906, %v537
      %v908 = vpop.permute.xlu0 %907
      %v910 = vlaneseq
      %v911 = vshrl.u32 %v910, 7
      %v912 = vsub.s32 0, %v911
      %v913 = vrot.slane %v511, %v912
      %v914 = vlaneseq
      %v915 = vshrl.u32 %v914, 7
      %v916 = vsub.s32 0, %v915
      %v917 = vrot.slane %v512, %v916
      %v918 = vmul.f32 %v908, %v913
      %v919 = vmul.f32 %v908, %v917
      %v920 = vadd.f32 %v904, %v918
      %v921 = vadd.f32 %v905, %v919
      %922 = vset.pattern.permute.xlu0 21
      %923 = vperm.xlu0 %922, %v537
      %v924 = vpop.permute.xlu0 %923
      %v926 = vlaneseq
      %v927 = vshrl.u32 %v926, 7
      %v928 = vsub.s32 1, %v927
      %v929 = vrot.slane %v511, %v928
      %v930 = vlaneseq
      %v931 = vshrl.u32 %v930, 7
      %v932 = vsub.s32 1, %v931
      %v933 = vrot.slane %v512, %v932
      %v934 = vmul.f32 %v924, %v929
      %v935 = vmul.f32 %v924, %v933
      %v936 = vadd.f32 %v920, %v934
      %v937 = vadd.f32 %v921, %v935
      %938 = vset.pattern.permute.xlu0 22
      %939 = vperm.xlu0 %938, %v537
      %v940 = vpop.permute.xlu0 %939
      %v942 = vlaneseq
      %v943 = vshrl.u32 %v942, 7
      %v944 = vsub.s32 2, %v943
      %v945 = vrot.slane %v511, %v944
      %v946 = vlaneseq
      %v947 = vshrl.u32 %v946, 7
      %v948 = vsub.s32 2, %v947
      %v949 = vrot.slane %v512, %v948
      %v950 = vmul.f32 %v940, %v945
      %v951 = vmul.f32 %v940, %v949
      %v952 = vadd.f32 %v936, %v950
      %v953 = vadd.f32 %v937, %v951
      %954 = vset.pattern.permute.xlu0 23
      %955 = vperm.xlu0 %954, %v537
      %v956 = vpop.permute.xlu0 %955
      %v958 = vlaneseq
      %v959 = vshrl.u32 %v958, 7
      %v960 = vsub.s32 3, %v959
      %v961 = vrot.slane %v511, %v960
      %v962 = vlaneseq
      %v963 = vshrl.u32 %v962, 7
      %v964 = vsub.s32 3, %v963
      %v965 = vrot.slane %v512, %v964
      %v966 = vmul.f32 %v956, %v961
      %v967 = vmul.f32 %v956, %v965
      %v968 = vadd.f32 %v952, %v966
      %v969 = vadd.f32 %v953, %v967
      %970 = vset.pattern.permute.xlu0 24
      %971 = vperm.xlu0 %970, %v537
      %v972 = vpop.permute.xlu0 %971
      %v974 = vlaneseq
      %v975 = vshrl.u32 %v974, 7
      %v976 = vsub.s32 0, %v975
      %v977 = vrot.slane %v531, %v976
      %v978 = vlaneseq
      %v979 = vshrl.u32 %v978, 7
      %v980 = vsub.s32 0, %v979
      %v981 = vrot.slane %v532, %v980
      %v982 = vmul.f32 %v972, %v977
      %v983 = vmul.f32 %v972, %v981
      %v984 = vadd.f32 %v968, %v982
      %v985 = vadd.f32 %v969, %v983
      %986 = vset.pattern.permute.xlu0 25
      %987 = vperm.xlu0 %986, %v537
      %v988 = vpop.permute.xlu0 %987
      %v990 = vlaneseq
      %v991 = vshrl.u32 %v990, 7
      %v992 = vsub.s32 1, %v991
      %v993 = vrot.slane %v531, %v992
      %v994 = vlaneseq
      %v995 = vshrl.u32 %v994, 7
      %v996 = vsub.s32 1, %v995
      %v997 = vrot.slane %v532, %v996
      %v998 = vmul.f32 %v988, %v993
      %v999 = vmul.f32 %v988, %v997
      %v1000 = vadd.f32 %v984, %v998
      %v1001 = vadd.f32 %v985, %v999
      %1002 = vset.pattern.permute.xlu0 26
      %1003 = vperm.xlu0 %1002, %v537
      %v1004 = vpop.permute.xlu0 %1003
      %v1006 = vlaneseq
      %v1007 = vshrl.u32 %v1006, 7
      %v1008 = vsub.s32 2, %v1007
      %v1009 = vrot.slane %v531, %v1008
      %v1010 = vlaneseq
      %v1011 = vshrl.u32 %v1010, 7
      %v1012 = vsub.s32 2, %v1011
      %v1013 = vrot.slane %v532, %v1012
      %v1014 = vmul.f32 %v1004, %v1009
      %v1015 = vmul.f32 %v1004, %v1013
      %v1016 = vadd.f32 %v1000, %v1014
      %v1017 = vadd.f32 %v1001, %v1015
      %1018 = vset.pattern.permute.xlu0 27
      %1019 = vperm.xlu0 %1018, %v537
      %v1020 = vpop.permute.xlu0 %1019
      %v1022 = vlaneseq
      %v1023 = vshrl.u32 %v1022, 7
      %v1024 = vsub.s32 3, %v1023
      %v1025 = vrot.slane %v531, %v1024
      %v1026 = vlaneseq
      %v1027 = vshrl.u32 %v1026, 7
      %v1028 = vsub.s32 3, %v1027
      %v1029 = vrot.slane %v532, %v1028
      %v1030 = vmul.f32 %v1020, %v1025
      %v1031 = vmul.f32 %v1020, %v1029
      %v1032 = vadd.f32 %v1016, %v1030
      %v1033 = vadd.f32 %v1017, %v1031
      %1034 = vset.pattern.permute.xlu0 28
      %1035 = vperm.xlu0 %1034, %v537
      %v1036 = vpop.permute.xlu0 %1035
      %v1038 = vlaneseq
      %v1039 = vshrl.u32 %v1038, 7
      %v1040 = vsub.s32 0, %v1039
      %v1041 = vrot.slane %v458, %v1040
      %v1042 = vlaneseq
      %v1043 = vshrl.u32 %v1042, 7
      %v1044 = vsub.s32 0, %v1043
      %v1045 = vrot.slane %v459, %v1044
      %v1046 = vmul.f32 %v1036, %v1041
      %v1047 = vmul.f32 %v1036, %v1045
      %v1048 = vadd.f32 %v1032, %v1046
      %v1049 = vadd.f32 %v1033, %v1047
      %1050 = vset.pattern.permute.xlu0 29
      %1051 = vperm.xlu0 %1050, %v537
      %v1052 = vpop.permute.xlu0 %1051
      %v1054 = vlaneseq
      %v1055 = vshrl.u32 %v1054, 7
      %v1056 = vsub.s32 1, %v1055
      %v1057 = vrot.slane %v458, %v1056
      %v1058 = vlaneseq
      %v1059 = vshrl.u32 %v1058, 7
      %v1060 = vsub.s32 1, %v1059
      %v1061 = vrot.slane %v459, %v1060
      %v1062 = vmul.f32 %v1052, %v1057
      %v1063 = vmul.f32 %v1052, %v1061
      %v1064 = vadd.f32 %v1048, %v1062
      %v1065 = vadd.f32 %v1049, %v1063
      %1066 = vset.pattern.permute.xlu0 30
      %1067 = vperm.xlu0 %1066, %v537
      %v1068 = vpop.permute.xlu0 %1067
      %v1070 = vlaneseq
      %v1071 = vshrl.u32 %v1070, 7
      %v1072 = vsub.s32 2, %v1071
      %v1073 = vrot.slane %v458, %v1072
      %v1074 = vlaneseq
      %v1075 = vshrl.u32 %v1074, 7
      %v1076 = vsub.s32 2, %v1075
      %v1077 = vrot.slane %v459, %v1076
      %v1078 = vmul.f32 %v1068, %v1073
      %v1079 = vmul.f32 %v1068, %v1077
      %v1080 = vadd.f32 %v1064, %v1078
      %v1081 = vadd.f32 %v1065, %v1079
      %1082 = vset.pattern.permute.xlu0 31
      %1083 = vperm.xlu0 %1082, %v537
      %v1084 = vpop.permute.xlu0 %1083
      %v1086 = vlaneseq
      %v1087 = vshrl.u32 %v1086, 7
      %v1088 = vsub.s32 3, %v1087
      %v1089 = vrot.slane %v458, %v1088
      %v1090 = vlaneseq
      %v1091 = vshrl.u32 %v1090, 7
      %v1092 = vsub.s32 3, %v1091
      %v1093 = vrot.slane %v459, %v1092
      %v1094 = vmul.f32 %v1084, %v1089
      %v1095 = vmul.f32 %v1084, %v1093
      %v1096 = vadd.f32 %v1080, %v1094
      %v1097 = vadd.f32 %v1081, %v1095
      %1098 = vset.pattern.permute.xlu0 32
      %1099 = vperm.xlu0 %1098, %v537
      %v1100 = vpop.permute.xlu0 %1099
      %v1102 = vlaneseq
      %v1103 = vshrl.u32 %v1102, 7
      %v1104 = vsub.s32 0, %v1103
      %v1105 = vrot.slane %v533, %v1104
      %v1106 = vlaneseq
      %v1107 = vshrl.u32 %v1106, 7
      %v1108 = vsub.s32 0, %v1107
      %v1109 = vrot.slane %v534, %v1108
      %v1110 = vmul.f32 %v1100, %v1105
      %v1111 = vmul.f32 %v1100, %v1109
      %v1112 = vadd.f32 %v1096, %v1110
      %v1113 = vadd.f32 %v1097, %v1111
      %1114 = vset.pattern.permute.xlu0 33
      %1115 = vperm.xlu0 %1114, %v537
      %v1116 = vpop.permute.xlu0 %1115
      %v1118 = vlaneseq
      %v1119 = vshrl.u32 %v1118, 7
      %v1120 = vsub.s32 1, %v1119
      %v1121 = vrot.slane %v533, %v1120
      %v1122 = vlaneseq
      %v1123 = vshrl.u32 %v1122, 7
      %v1124 = vsub.s32 1, %v1123
      %v1125 = vrot.slane %v534, %v1124
      %v1126 = vmul.f32 %v1116, %v1121
      %v1127 = vmul.f32 %v1116, %v1125
      %v1128 = vadd.f32 %v1112, %v1126
      %v1129 = vadd.f32 %v1113, %v1127
      %1130 = vset.pattern.permute.xlu0 34
      %1131 = vperm.xlu0 %1130, %v537
      %v1132 = vpop.permute.xlu0 %1131
      %v1134 = vlaneseq
      %v1135 = vshrl.u32 %v1134, 7
      %v1136 = vsub.s32 2, %v1135
      %v1137 = vrot.slane %v533, %v1136
      %v1138 = vlaneseq
      %v1139 = vshrl.u32 %v1138, 7
      %v1140 = vsub.s32 2, %v1139
      %v1141 = vrot.slane %v534, %v1140
      %v1142 = vmul.f32 %v1132, %v1137
      %v1143 = vmul.f32 %v1132, %v1141
      %v1144 = vadd.f32 %v1128, %v1142
      %v1145 = vadd.f32 %v1129, %v1143
      %1146 = vset.pattern.permute.xlu0 35
      %1147 = vperm.xlu0 %1146, %v537
      %v1148 = vpop.permute.xlu0 %1147
      %v1150 = vlaneseq
      %v1151 = vshrl.u32 %v1150, 7
      %v1152 = vsub.s32 3, %v1151
      %v1153 = vrot.slane %v533, %v1152
      %v1154 = vlaneseq
      %v1155 = vshrl.u32 %v1154, 7
      %v1156 = vsub.s32 3, %v1155
      %v1157 = vrot.slane %v534, %v1156
      %v1158 = vmul.f32 %v1148, %v1153
      %v1159 = vmul.f32 %v1148, %v1157
      %v1160 = vadd.f32 %v1144, %v1158
      %v1161 = vadd.f32 %v1145, %v1159
      %v1162 = vmax.f32 %v1160, 0.0
      %v1163 = vmax.f32 %v1161, 0.0
      %v1166 = vrot.slane %v1162, 4
      %v1167 = vrot.slane %v1163, 4
      %1170 = vst [vmem:[%s380] sm:$0xf0] %v1166
      %1171 = vst [vmem:[%s380 + $0x8] sm:$0xf0] %v1167
      %s1172 = smul.u32 2, %s21
      %p1173 = scmp.lt.s32.totalorder %s20, 1
      %s1174 = scalar_select %p1173, %s20, 1
      %p1175 = scmp.lt.s32.totalorder %s1172, 1
      %s1176 = scalar_select %p1175, %s1172, 1
      %s1177 = smul.addr %s1174, 2
      %s1178 = sadd.s32 %s1176, %s1177
      %s1179 = smul.addr %s1178, 8
      %s1180 = scalar_lea.vmem %s5, %s1179
      // Predicated region
      $region41: #{forward.1} parent=39 // pred_check
        %p1181 = pneg %p190
      $region42: #{forward.1} parent=39 // pred_check_branch
        %1183 = sbr.rel (%p1181) target = $region44
      $region43: #{forward.1} parent=39 // pred_region
        %s1184 = smul.u32 2, %s21
      $region44: #{forward.1} parent=39 // pred_fallthru
        _
    $region40: #{forward.1} parent=5 // pred_fallthru
      _
    %p1185 = scmp.le.s32.totalorder 2, %s11
    // Predicated region
    $region45: #{forward.1} parent=5 // pred_check
      %p1186 = pneg %p1185
    $region46: #{forward.1} parent=5 // pred_check_branch
      %1188 = sbr.rel (%p1186) target = $region48
    $region47: #{forward.1} parent=5 // pred_region
      %s1189 = ssub.s32 %s11, 2
      // Predicated region
      $region49: #{forward.1} parent=47 // pred_check
        %p1190 = pneg %p196
      $region50: #{forward.1} parent=47 // pred_check_branch
        %1192 = sbr.rel (%p1190) target = $region52
      $region51: #{forward.1} parent=47 // pred_region
        %s1193 = smul.u32 2, %s23
        %p1194 = scmp.lt.s32.totalorder %s22, 1
        %s1195 = scalar_select %p1194, %s22, 1
        %p1196 = scmp.lt.s32.totalorder %s1193, 1
        %s1197 = scalar_select %p1196, %s1193, 1
        %s1198 = smul.addr %s1195, 2
        %s1199 = sadd.s32 %s1197, %s1198
        %s1200 = smul.addr %s1199, 8
        %s1201 = scalar_lea.vmem %s5, %s1200
      $region52: #{forward.1} parent=47 // pred_fallthru
        _
    $region48: #{forward.1} parent=5 // pred_fallthru
      _
  $region6: #{forward.1} parent=0 // loop_footer
    %s15 = sadd.s32 1, %s11
  $region7: #{forward.1} parent=0 // loop_footer_branch
    %10 = sbr.rel target = $region3
  $region8: #{forward.1} parent=0 // loop_exit
    _

</llo_original>
